<compile_context>
chip_gen: v7x
topology: tpu7x:2x2x1
jax: 0.10.0
libtpu: 0.0.40
codegen_flags: <defaults>
</compile_context>

<pallas_src>
import functools
import math

import jax
import jax.numpy as jnp
from jax.experimental import pallas as pl
from jax.experimental.pallas import tpu as pltpu

_MATMUL_DTYPE = jnp.bfloat16            # MXU operand dtype (accum stays f32)
_LN_EPS = 1e-5                          # nn.LayerNorm default


# --------------------------- per-generation budgets ---------------------------

def _default_vmem_limit():
    """Scoped-VMEM cap derived from the chip (half of physical, capped 64 MiB)."""
    try:
        info = pltpu.get_tpu_info()
        phys = int(getattr(info, "vmem_capacity_bytes"))
        return max(32 * 1024 * 1024, min(phys // 2, 64 * 1024 * 1024))
    except Exception:
        return 32 * 1024 * 1024         # safe on v5e/v6e/v7x


_VMEM_LIMIT = _default_vmem_limit()
# Bigger row tiles when VMEM is plentiful (v5e/v6e 128 MiB), tighter on v7x.
_ROW_TILE_MAX = 512 if _VMEM_LIMIT >= 48 * 1024 * 1024 else 256


# ------------------------------ tiling helpers -------------------------------

def _round_up(x, m):
    return (x + m - 1) // m * m


def _tile_rows(M, max_tile=None):
    """Row tile (multiple of 8, capped); returns (tile_m, padded_M)."""
    if max_tile is None:
        max_tile = _ROW_TILE_MAX
    mp8 = _round_up(M, 8)
    if mp8 <= max_tile:
        return mp8, mp8
    return max_tile, _round_up(M, max_tile)


def _tile_cols(N, max_tile=1024):
    """Column tile: pad to lane-dense multiple of 128; returns (tile_n, padded_N)."""
    np_ = _round_up(N, 128)
    if np_ <= max_tile:
        return np_, np_
    tn = 128
    while tn * 2 <= max_tile and np_ % (tn * 2) == 0:
        tn *= 2
    return tn, np_


def _pad2d(x, rows, cols):
    r, c = x.shape
    if r == rows and c == cols:
        return x
    return jnp.pad(x, ((0, rows - r), (0, cols - c)))


# ------------------------------ Pallas kernels -------------------------------

def _layernorm(y, g, b):
    mean = jnp.mean(y, axis=-1, keepdims=True)
    var = jnp.mean(jnp.square(y - mean), axis=-1, keepdims=True)
    return (y - mean) * jax.lax.rsqrt(var + _LN_EPS) * g + b


def _linear_kernel(x_ref, w_ref, b_ref, o_ref):
    acc = jnp.dot(x_ref[...].astype(_MATMUL_DTYPE),
                  w_ref[...].astype(_MATMUL_DTYPE),   # no-op: weights pre-cast bf16
                  preferred_element_type=jnp.float32)
    o_ref[...] = (acc + b_ref[...]).astype(o_ref.dtype)


def linear(x2d, w, b, out_dtype=jnp.float32):
    """y = x @ w + b.  Columns outer / rows inner so the weight block stays
    resident across the row sweep (streamed once, not once per row tile)."""
    M, K = x2d.shape
    N = w.shape[1]
    tm, Mp = _tile_rows(M)
    tn, Np = _tile_cols(N)
    xp = _pad2d(x2d, Mp, K)
    wp = _pad2d(w, K, Np)
    bp = _pad2d(b.reshape(1, N), 1, Np)
    out = pl.pallas_call(
        _linear_kernel,
        out_shape=jax.ShapeDtypeStruct((Mp, Np), out_dtype),
        grid=(Np // tn, Mp // tm),                       # cols outer, rows inner
        in_specs=[pl.BlockSpec((tm, K), lambda j, i: (i, 0)),
                  pl.BlockSpec((K, tn), lambda j, i: (0, j)),
                  pl.BlockSpec((1, tn), lambda j, i: (0, j))],
        out_specs=pl.BlockSpec((tm, tn), lambda j, i: (i, j)),
        compiler_params=pltpu.CompilerParams(
            dimension_semantics=("parallel", "parallel"),
            vmem_limit_bytes=_VMEM_LIMIT),
    )(xp, wp, bp)
    return out[:M, :N]


def _linear_add_ln_kernel(x_ref, w_ref, b_ref, r_ref, g_ref, beta_ref, o_ref):
    y = jnp.dot(x_ref[...].astype(_MATMUL_DTYPE),
                w_ref[...].astype(_MATMUL_DTYPE),
                preferred_element_type=jnp.float32) + b_ref[...]
    y = y + r_ref[...]
    o_ref[...] = _layernorm(y, g_ref[...], beta_ref[...])


def linear_add_ln(x2d, w, b, resid2d, gamma, beta):
    """LayerNorm(resid + x @ w + b): fused out-projection + residual + post-norm."""
    M, K = x2d.shape
    E = w.shape[1]
    tm, Mp = _tile_rows(M)
    xp = _pad2d(x2d, Mp, K)
    rp = _pad2d(resid2d, Mp, E)
    out = pl.pallas_call(
        _linear_add_ln_kernel,
        out_shape=jax.ShapeDtypeStruct((Mp, E), jnp.float32),
        grid=(Mp // tm,),
        in_specs=[pl.BlockSpec((tm, K), lambda i: (i, 0)),
                  pl.BlockSpec((K, E), lambda i: (0, 0)),
                  pl.BlockSpec((1, E), lambda i: (0, 0)),
                  pl.BlockSpec((tm, E), lambda i: (i, 0)),
                  pl.BlockSpec((1, E), lambda i: (0, 0)),
                  pl.BlockSpec((1, E), lambda i: (0, 0))],
        out_specs=pl.BlockSpec((tm, E), lambda i: (i, 0)),
        compiler_params=pltpu.CompilerParams(
            dimension_semantics=("parallel",),
            vmem_limit_bytes=_VMEM_LIMIT),
    )(xp, w, b.reshape(1, E), rp, gamma.reshape(1, E), beta.reshape(1, E))
    return out[:M]


def _ffn_add_ln_kernel(x_ref, w1_ref, b1_ref, w2_ref, b2_ref, g_ref, beta_ref,
                       o_ref):
    x = x_ref[...]
    h = jnp.dot(x.astype(_MATMUL_DTYPE), w1_ref[...].astype(_MATMUL_DTYPE),
                preferred_element_type=jnp.float32) + b1_ref[...]
    h = jnp.maximum(h, 0.0)                      # ReLU (nn.Transformer default)
    y = jnp.dot(h.astype(_MATMUL_DTYPE), w2_ref[...].astype(_MATMUL_DTYPE),
                preferred_element_type=jnp.float32) + b2_ref[...]
    o_ref[...] = _layernorm(y + x, g_ref[...], beta_ref[...])


def ffn_add_ln(x2d, w1, b1, w2, b2, gamma, beta):
    """LayerNorm(x + W2 relu(W1 x + b1) + b2): fused FFN + residual + post-norm."""
    M, E = x2d.shape
    F = w1.shape[1]
    tm, Mp = _tile_rows(M)
    xp = _pad2d(x2d, Mp, E)
    out = pl.pallas_call(
        _ffn_add_ln_kernel,
        out_shape=jax.ShapeDtypeStruct((Mp, E), jnp.float32),
        grid=(Mp // tm,),
        in_specs=[pl.BlockSpec((tm, E), lambda i: (i, 0)),
                  pl.BlockSpec((E, F), lambda i: (0, 0)),
                  pl.BlockSpec((1, F), lambda i: (0, 0)),
                  pl.BlockSpec((F, E), lambda i: (0, 0)),
                  pl.BlockSpec((1, E), lambda i: (0, 0)),
                  pl.BlockSpec((1, E), lambda i: (0, 0)),
                  pl.BlockSpec((1, E), lambda i: (0, 0))],
        out_specs=pl.BlockSpec((tm, E), lambda i: (i, 0)),
        compiler_params=pltpu.CompilerParams(
            dimension_semantics=("parallel",),
            vmem_limit_bytes=_VMEM_LIMIT),
    )(xp, w1, b1.reshape(1, F), w2, b2.reshape(1, E),
      gamma.reshape(1, E), beta.reshape(1, E))
    return out[:M]


def _ln_kernel(x_ref, g_ref, b_ref, o_ref):
    o_ref[...] = _layernorm(x_ref[...], g_ref[...], b_ref[...])


def layernorm(x2d, gamma, beta):
    """Standalone LayerNorm (final encoder/decoder norms)."""
    M, E = x2d.shape
    tm, Mp = _tile_rows(M)
    xp = _pad2d(x2d, Mp, E)
    out = pl.pallas_call(
        _ln_kernel,
        out_shape=jax.ShapeDtypeStruct((Mp, E), jnp.float32),
        grid=(Mp // tm,),
        in_specs=[pl.BlockSpec((tm, E), lambda i: (i, 0)),
                  pl.BlockSpec((1, E), lambda i: (0, 0)),
                  pl.BlockSpec((1, E), lambda i: (0, 0))],
        out_specs=pl.BlockSpec((tm, E), lambda i: (i, 0)),
        compiler_params=pltpu.CompilerParams(
            dimension_semantics=("parallel",),
            vmem_limit_bytes=_VMEM_LIMIT),
    )(xp, gamma.reshape(1, E), beta.reshape(1, E))
    return out[:M]


# ------------------------------ attention kernel ------------------------------

def _attn_kernel(q_ref, k_ref, v_ref, o_ref, *, scale):
    # Head-batched scaled-dot-product attention on VMEM-resident tiles.
    q = q_ref[...].astype(_MATMUL_DTYPE)          # [H, tq, hd]
    k = k_ref[...].astype(_MATMUL_DTYPE)          # [H, Lk, hd]
    v = v_ref[...].astype(_MATMUL_DTYPE)          # [H, Lk, hd]
    s = jax.lax.dot_general(q, k, (((2,), (2,)), ((0,), (0,))),
                            preferred_element_type=jnp.float32) * scale
    s = s - jnp.max(s, axis=-1, keepdims=True)
    e = jnp.exp(s)
    p = e * pl.reciprocal(jnp.sum(e, axis=-1, keepdims=True), approx=True)
    o = jax.lax.dot_general(p.astype(_MATMUL_DTYPE), v,
                            (((2,), (1,)), ((0,), (0,))),
                            preferred_element_type=jnp.float32)
    o_ref[...] = o.astype(o_ref.dtype)


def _attention(q4, k4, v4):
    """q4: [N, H, Lq, hd], k4/v4: [N, H, Lk, hd] -> [N, H, Lq, hd] (bf16)."""
    N, H, Lq, hd = q4.shape
    Lk = k4.shape[2]
    tq, Lqp = _tile_rows(Lq, max_tile=256)
    if Lqp != Lq:
        q4 = jnp.pad(q4, ((0, 0), (0, 0), (0, Lqp - Lq), (0, 0)))
    scale = 1.0 / math.sqrt(hd)
    out = pl.pallas_call(
        functools.partial(_attn_kernel, scale=scale),
        out_shape=jax.ShapeDtypeStruct((N, H, Lqp, hd), jnp.bfloat16),
        grid=(N, Lqp // tq),
        in_specs=[pl.BlockSpec((None, H, tq, hd), lambda b, qi: (b, 0, qi, 0)),
                  pl.BlockSpec((None, H, Lk, hd), lambda b, qi: (b, 0, 0, 0)),
                  pl.BlockSpec((None, H, Lk, hd), lambda b, qi: (b, 0, 0, 0))],
        out_specs=pl.BlockSpec((None, H, tq, hd), lambda b, qi: (b, 0, qi, 0)),
        compiler_params=pltpu.CompilerParams(
            dimension_semantics=("parallel", "parallel"),
            vmem_limit_bytes=_VMEM_LIMIT),
    )(q4, k4, v4)
    return out[:, :, :Lq, :]


def _heads(x_flat, N, L, H, hd):
    # [N*L, E] -> [N, H, L, hd]  (bf16 slab; XLA-side layout shuffle)
    return x_flat.reshape(N, L, H, hd).transpose(0, 2, 1, 3)


def _merge_heads(x4, N, L, E):
    # [N, H, L, hd] -> [N*L, E]
    return x4.transpose(0, 2, 1, 3).reshape(N * L, E)


def self_attention(qkv_flat, nhead, N, L):
    """qkv_flat: [N*L, 3E] (fused QKV projection, bf16) -> [N*L, E] (bf16)."""
    E = qkv_flat.shape[1] // 3
    hd = E // nhead
    q = _heads(qkv_flat[:, :E], N, L, nhead, hd)
    k = _heads(qkv_flat[:, E:2 * E], N, L, nhead, hd)
    v = _heads(qkv_flat[:, 2 * E:], N, L, nhead, hd)
    return _merge_heads(_attention(q, k, v), N, L, E)


def cross_attention(q_flat, kv_flat, nhead, N, Lq, Lk):
    """q_flat: [N*Lq, E], kv_flat: [N*Lk, 2E] (bf16) -> [N*Lq, E] (bf16)."""
    E = q_flat.shape[1]
    hd = E // nhead
    q = _heads(q_flat, N, Lq, nhead, hd)
    k = _heads(kv_flat[:, :E], N, Lk, nhead, hd)
    v = _heads(kv_flat[:, E:], N, Lk, nhead, hd)
    return _merge_heads(_attention(q, k, v), N, Lq, E)


# ------------------------------ model (JAX glue) ------------------------------

def encoder_layer(x, p, nhead, N, S):
    qkv = linear(x, p["self_attn"]["w_qkv"], p["self_attn"]["b_qkv"],
                 out_dtype=jnp.bfloat16)
    a = self_attention(qkv, nhead, N, S)
    x = linear_add_ln(a, p["self_attn"]["wo"], p["self_attn"]["bo"],
                      x, p["norm1_g"], p["norm1_b"])
    x = ffn_add_ln(x, p["w1"], p["b1"], p["w2"], p["b2"],
                   p["norm2_g"], p["norm2_b"])
    return x


def decoder_layer(x, mem, p, nhead, N, T, S):
    qkv = linear(x, p["self_attn"]["w_qkv"], p["self_attn"]["b_qkv"],
                 out_dtype=jnp.bfloat16)
    a = self_attention(qkv, nhead, N, T)
    x = linear_add_ln(a, p["self_attn"]["wo"], p["self_attn"]["bo"],
                      x, p["norm1_g"], p["norm1_b"])
    q = linear(x, p["cross_attn"]["wq"], p["cross_attn"]["bq"],
               out_dtype=jnp.bfloat16)
    kv = linear(mem, p["cross_attn"]["w_kv"], p["cross_attn"]["b_kv"],
                out_dtype=jnp.bfloat16)
    c = cross_attention(q, kv, nhead, N, T, S)
    x = linear_add_ln(c, p["cross_attn"]["wo"], p["cross_attn"]["bo"],
                      x, p["norm2_g"], p["norm2_b"])
    x = ffn_add_ln(x, p["w1"], p["b1"], p["w2"], p["b2"],
                   p["norm3_g"], p["norm3_b"])
    return x


def transformer_language_model_forward(params, src_tok, tgt_tok, nhead):
    """src_tok / tgt_tok: int32 [seq, batch] -> logits [tgt_seq, batch, vocab]."""
    E = params["embedding"].shape[1]
    assert E % nhead == 0, "d_model must be divisible by nhead"
    S, N = src_tok.shape
    T = tgt_tok.shape[0]
    # Batch-first internal layout ([N, L, E] flattened): no activation
    # transposes; the only output transpose is on the final (small) logits.
    src = jnp.take(params["embedding"], src_tok.T, axis=0).reshape(N * S, E)
    tgt = jnp.take(params["embedding"], tgt_tok.T, axis=0).reshape(N * T, E)

    mem = src
    for lp in params["encoder_layers"]:
        mem = encoder_layer(mem, lp, nhead, N, S)
    mem = layernorm(mem, params["enc_norm_g"], params["enc_norm_b"])

    out = tgt
    for lp in params["decoder_layers"]:
        out = decoder_layer(out, mem, lp, nhead, N, T, S)
    out = layernorm(out, params["dec_norm_g"], params["dec_norm_b"])

    V = params["fc_w"].shape[1]
    logits = linear(out, params["fc_w"], params["fc_b"])        # [N*T, V] f32
    return logits.reshape(N, T, V).transpose(1, 0, 2)            # [T, N, V]


# ----------------------------- deterministic init -----------------------------

class KeyGen:
    def __init__(self, key):
        self._key = key

    def __call__(self):
        self._key, sub = jax.random.split(self._key)
        return sub


def _w(kg, shape, scale=0.02):
    return scale * jax.random.normal(kg(), shape, dtype=jnp.float32)


def init_self_attn(kg, E):
    # Fused QKV weight: columns ordered [q | k | v]; equals torch's
    # in_proj_weight.T when porting a real nn.MultiheadAttention checkpoint.
    return dict(
        w_qkv=_w(kg, (E, 3 * E)), b_qkv=jnp.zeros((3 * E,), jnp.float32),
        wo=_w(kg, (E, E)), bo=jnp.zeros((E,), jnp.float32),
    )


def init_cross_attn(kg, E):
    return dict(
        wq=_w(kg, (E, E)), bq=jnp.zeros((E,), jnp.float32),
        w_kv=_w(kg, (E, 2 * E)), b_kv=jnp.zeros((2 * E,), jnp.float32),
        wo=_w(kg, (E, E)), bo=jnp.zeros((E,), jnp.float32),
    )


def init_encoder_layer(kg, E, F):
    return dict(
        self_attn=init_self_attn(kg, E),
        w1=_w(kg, (E, F)), b1=jnp.zeros((F,), jnp.float32),
        w2=_w(kg, (F, E)), b2=jnp.zeros((E,), jnp.float32),
        norm1_g=jnp.ones((E,), jnp.float32), norm1_b=jnp.zeros((E,), jnp.float32),
        norm2_g=jnp.ones((E,), jnp.float32), norm2_b=jnp.zeros((E,), jnp.float32),
    )


def init_decoder_layer(kg, E, F):
    p = init_encoder_layer(kg, E, F)
    p["cross_attn"] = init_cross_attn(kg, E)
    p["norm3_g"] = jnp.ones((E,), jnp.float32)
    p["norm3_b"] = jnp.zeros((E,), jnp.float32)
    return p


def init_params(kg, vocab_size, d_model, num_encoder_layers, num_decoder_layers,
                dim_ff):
    return dict(
        embedding=_w(kg, (vocab_size, d_model), scale=1.0),
        encoder_layers=[init_encoder_layer(kg, d_model, dim_ff)
                        for _ in range(num_encoder_layers)],
        decoder_layers=[init_decoder_layer(kg, d_model, dim_ff)
                        for _ in range(num_decoder_layers)],
        enc_norm_g=jnp.ones((d_model,), jnp.float32),
        enc_norm_b=jnp.zeros((d_model,), jnp.float32),
        dec_norm_g=jnp.ones((d_model,), jnp.float32),
        dec_norm_b=jnp.zeros((d_model,), jnp.float32),
        fc_w=_w(kg, (d_model, vocab_size)),
        fc_b=jnp.zeros((vocab_size,), jnp.float32),
    )


# Pre-cast matmul weight matrices to bf16 ONCE (halves weight DMA bytes and
# removes in-kernel per-step casts). LN params / biases stay f32.
_BF16_KEYS = frozenset(["w_qkv", "wo", "wq", "w_kv", "w1", "w2", "fc_w"])


def cast_weights_bf16(obj):
    if isinstance(obj, dict):
        out = {}
        for k, v in obj.items():
            if isinstance(v, (dict, list)):
                out[k] = cast_weights_bf16(v)
            elif k in _BF16_KEYS:
                out[k] = v.astype(jnp.bfloat16)
            else:
                out[k] = v
        return out
    if isinstance(obj, list):
        return [cast_weights_bf16(v) for v in obj]
    return obj


# ------------------------------------ main ------------------------------------

if __name__ == "__main__":
    # Small shapes consistent with the module (defaults d_model=256, nhead=4,
    # num_encoder_layers=4, decoder_layers=6, dim_feedforward=2048 — scaled
    # down for a quick synthetic run).
    vocab_size = 65
    d_model = 32
    nhead = 4
    num_encoder_layers = 2
    num_decoder_layers = 2
    dim_feedforward = 64
    S, T, N = 8, 8, 2            # src seq, tgt seq, batch (batch_first=False API)

    kg = KeyGen(jax.random.PRNGKey(0))
    params = init_params(kg, vocab_size, d_model,
                         num_encoder_layers, num_decoder_layers, dim_feedforward)
    params = cast_weights_bf16(params)     # one-time bf16 cast of matmul weights

    src = jax.random.randint(kg(), (S, N), 0, vocab_size, dtype=jnp.int32)
    tgt = jax.random.randint(kg(), (T, N), 0, vocab_size, dtype=jnp.int32)

    fwd = jax.jit(lambda s, t: transformer_language_model_forward(params, s, t, nhead))
    logits = fwd(src, tgt)
    jax.block_until_ready(logits)

    assert logits.shape == (T, N, vocab_size), logits.shape
    assert bool(jnp.all(jnp.isfinite(logits)))
    print("KERNEL_OK")
</pallas_src>

<mosaic_0001>
module attributes {stable_mosaic.version = 11 : i64} {
  func.func @_linear_add_ln_kernel(%arg0: i32, %arg1: memref<16x32xbf16, #tpu.memory_space<vmem>>, %arg2: memref<32x32xbf16, #tpu.memory_space<vmem>>, %arg3: memref<1x32xf32, #tpu.memory_space<vmem>>, %arg4: memref<16x32xf32, #tpu.memory_space<vmem>>, %arg5: memref<1x32xf32, #tpu.memory_space<vmem>>, %arg6: memref<1x32xf32, #tpu.memory_space<vmem>>, %arg7: memref<16x32xf32, #tpu.memory_space<vmem>>) attributes {dimension_semantics = [#tpu.dimension_semantics<parallel>], iteration_bounds = array<i64: 1>, scalar_prefetch = 0 : i64, scratch_operands = 0 : i64, tpu.core_type = #tpu.core_type<tc>, window_params = [{transform_indices = @transform_0, window_bounds = array<i64: 16, 32>}, {pipeline_mode = #tpu.pipeline_mode<synchronous>, transform_indices = @transform_1, window_bounds = array<i64: 32, 32>}, {pipeline_mode = #tpu.pipeline_mode<synchronous>, transform_indices = @transform_2, window_bounds = array<i64: 1, 32>}, {transform_indices = @transform_3, window_bounds = array<i64: 16, 32>}, {pipeline_mode = #tpu.pipeline_mode<synchronous>, transform_indices = @transform_4, window_bounds = array<i64: 1, 32>}, {pipeline_mode = #tpu.pipeline_mode<synchronous>, transform_indices = @transform_5, window_bounds = array<i64: 1, 32>}, {transform_indices = @transform_6, window_bounds = array<i64: 16, 32>}]} {
    %c0 = arith.constant 0 : index
    %c0_0 = arith.constant 0 : index
    %0 = vector.load %arg1[%c0, %c0_0] : memref<16x32xbf16, #tpu.memory_space<vmem>>, vector<16x32xbf16>
    %c0_1 = arith.constant 0 : index
    %c0_2 = arith.constant 0 : index
    %1 = vector.load %arg2[%c0_1, %c0_2] : memref<32x32xbf16, #tpu.memory_space<vmem>>, vector<32x32xbf16>
    %cst = arith.constant dense<0.000000e+00> : vector<16x32xf32>
    %2 = tpu.matmul %0, %1, %cst {dimension_numbers = #tpu.dot_dimension_numbers<[1], [0], [0], [1], [0, 0, 1, 1], [], []>} : vector<16x32xbf16>, vector<32x32xbf16>, vector<16x32xf32> -> vector<16x32xf32>
    %c0_3 = arith.constant 0 : index
    %c0_4 = arith.constant 0 : index
    %3 = vector.load %arg3[%c0_3, %c0_4] : memref<1x32xf32, #tpu.memory_space<vmem>>, vector<1x32xf32>
    %4 = vector.broadcast %3 : vector<1x32xf32> to vector<16x32xf32>
    %5 = arith.addf %2, %4 : vector<16x32xf32>
    %c0_5 = arith.constant 0 : index
    %c0_6 = arith.constant 0 : index
    %6 = vector.load %arg4[%c0_5, %c0_6] : memref<16x32xf32, #tpu.memory_space<vmem>>, vector<16x32xf32>
    %7 = arith.addf %5, %6 : vector<16x32xf32>
    %c0_7 = arith.constant 0 : index
    %c0_8 = arith.constant 0 : index
    %8 = vector.load %arg5[%c0_7, %c0_8] : memref<1x32xf32, #tpu.memory_space<vmem>>, vector<1x32xf32>
    %c0_9 = arith.constant 0 : index
    %c0_10 = arith.constant 0 : index
    %9 = vector.load %arg6[%c0_9, %c0_10] : memref<1x32xf32, #tpu.memory_space<vmem>>, vector<1x32xf32>
    %cst_11 = arith.constant dense<0.000000e+00> : vector<16xf32>
    %10 = vector.multi_reduction <add>, %7, %cst_11 [1] : vector<16x32xf32> to vector<16xf32>
    %11 = vector.shape_cast %10 : vector<16xf32> to vector<16x1xf32>
    %cst_12 = arith.constant 3.200000e+01 : f32
    %12 = vector.broadcast %cst_12 : f32 to vector<16x1xf32>
    %13 = arith.divf %11, %12 : vector<16x1xf32>
    %14 = vector.broadcast %13 : vector<16x1xf32> to vector<16x32xf32>
    %15 = arith.subf %7, %14 : vector<16x32xf32>
    %16 = arith.mulf %15, %15 : vector<16x32xf32>
    %cst_13 = arith.constant dense<0.000000e+00> : vector<16xf32>
    %17 = vector.multi_reduction <add>, %16, %cst_13 [1] : vector<16x32xf32> to vector<16xf32>
    %18 = vector.shape_cast %17 : vector<16xf32> to vector<16x1xf32>
    %cst_14 = arith.constant 3.200000e+01 : f32
    %19 = vector.broadcast %cst_14 : f32 to vector<16x1xf32>
    %20 = arith.divf %18, %19 : vector<16x1xf32>
    %21 = vector.broadcast %13 : vector<16x1xf32> to vector<16x32xf32>
    %22 = arith.subf %7, %21 : vector<16x32xf32>
    %cst_15 = arith.constant 9.99999974E-6 : f32
    %23 = vector.broadcast %cst_15 : f32 to vector<16x1xf32>
    %24 = arith.addf %20, %23 : vector<16x1xf32>
    %25 = math.rsqrt %24 : vector<16x1xf32>
    %26 = vector.broadcast %25 : vector<16x1xf32> to vector<16x32xf32>
    %27 = arith.mulf %22, %26 : vector<16x32xf32>
    %28 = vector.broadcast %8 : vector<1x32xf32> to vector<16x32xf32>
    %29 = arith.mulf %27, %28 : vector<16x32xf32>
    %30 = vector.broadcast %9 : vector<1x32xf32> to vector<16x32xf32>
    %31 = arith.addf %29, %30 : vector<16x32xf32>
    %c0_16 = arith.constant 0 : index
    %c0_17 = arith.constant 0 : index
    %32 = vector.load %arg7[%c0_16, %c0_17] : memref<16x32xf32, #tpu.memory_space<vmem>>, vector<16x32xf32>
    tpu.vector_store %arg7[%c0_16, %c0_17], %31 {strides = array<i32>} : memref<16x32xf32, #tpu.memory_space<vmem>>, vector<16x32xf32>,
    return
  }
  func.func @transform_0(%arg0: i32) -> (i32, i32) {
    %c0_i32 = arith.constant 0 : i32
    %c0_i32_0 = arith.constant 0 : i32
    return %arg0, %c0_i32 : i32, i32
  }
  func.func @transform_1(%arg0: i32) -> (i32, i32) {
    %c0_i32 = arith.constant 0 : i32
    %c0_i32_0 = arith.constant 0 : i32
    %c0_i32_1 = arith.constant 0 : i32
    return %c0_i32, %c0_i32_0 : i32, i32
  }
  func.func @transform_2(%arg0: i32) -> (i32, i32) {
    %c0_i32 = arith.constant 0 : i32
    %c0_i32_0 = arith.constant 0 : i32
    %c0_i32_1 = arith.constant 0 : i32
    return %c0_i32, %c0_i32_0 : i32, i32
  }
  func.func @transform_3(%arg0: i32) -> (i32, i32) {
    %c0_i32 = arith.constant 0 : i32
    %c0_i32_0 = arith.constant 0 : i32
    return %arg0, %c0_i32 : i32, i32
  }
  func.func @transform_4(%arg0: i32) -> (i32, i32) {
    %c0_i32 = arith.constant 0 : i32
    %c0_i32_0 = arith.constant 0 : i32
    %c0_i32_1 = arith.constant 0 : i32
    return %c0_i32, %c0_i32_0 : i32, i32
  }
  func.func @transform_5(%arg0: i32) -> (i32, i32) {
    %c0_i32 = arith.constant 0 : i32
    %c0_i32_0 = arith.constant 0 : i32
    %c0_i32_1 = arith.constant 0 : i32
    return %c0_i32, %c0_i32_0 : i32, i32
  }
  func.func @transform_6(%arg0: i32) -> (i32, i32) {
    %c0_i32 = arith.constant 0 : i32
    %c0_i32_0 = arith.constant 0 : i32
    return %arg0, %c0_i32 : i32, i32
  }
}

module attributes {stable_mosaic.version = 11 : i64} {
  func.func @_linear_kernel(%arg0: i32, %arg1: i32, %arg2: memref<16x32xf32, #tpu.memory_space<vmem>>, %arg3: memref<32x128xbf16, #tpu.memory_space<vmem>>, %arg4: memref<1x128xf32, #tpu.memory_space<vmem>>, %arg5: memref<16x128xbf16, #tpu.memory_space<vmem>>) attributes {dimension_semantics = [#tpu.dimension_semantics<parallel>, #tpu.dimension_semantics<parallel>], iteration_bounds = array<i64: 1, 1>, scalar_prefetch = 0 : i64, scratch_operands = 0 : i64, tpu.core_type = #tpu.core_type<tc>, window_params = [{transform_indices = @transform_0, window_bounds = array<i64: 16, 32>}, {transform_indices = @transform_1, window_bounds = array<i64: 32, 128>}, {transform_indices = @transform_2, window_bounds = array<i64: 1, 128>}, {transform_indices = @transform_3, window_bounds = array<i64: 16, 128>}]} {
    %c0 = arith.constant 0 : index
    %c0_0 = arith.constant 0 : index
    %0 = vector.load %arg2[%c0, %c0_0] : memref<16x32xf32, #tpu.memory_space<vmem>>, vector<16x32xf32>
    %1 = arith.truncf %0 : vector<16x32xf32> to vector<16x32xbf16>
    %c0_1 = arith.constant 0 : index
    %c0_2 = arith.constant 0 : index
    %2 = vector.load %arg3[%c0_1, %c0_2] : memref<32x128xbf16, #tpu.memory_space<vmem>>, vector<32x128xbf16>
    %cst = arith.constant dense<0.000000e+00> : vector<16x128xf32>
    %3 = tpu.matmul %1, %2, %cst {dimension_numbers = #tpu.dot_dimension_numbers<[1], [0], [0], [1], [0, 0, 1, 1], [], []>} : vector<16x32xbf16>, vector<32x128xbf16>, vector<16x128xf32> -> vector<16x128xf32>
    %c0_3 = arith.constant 0 : index
    %c0_4 = arith.constant 0 : index
    %4 = vector.load %arg4[%c0_3, %c0_4] : memref<1x128xf32, #tpu.memory_space<vmem>>, vector<1x128xf32>
    %5 = vector.broadcast %4 : vector<1x128xf32> to vector<16x128xf32>
    %6 = arith.addf %3, %5 : vector<16x128xf32>
    %7 = arith.truncf %6 : vector<16x128xf32> to vector<16x128xbf16>
    %c0_5 = arith.constant 0 : index
    %c0_6 = arith.constant 0 : index
    %8 = vector.load %arg5[%c0_5, %c0_6] : memref<16x128xbf16, #tpu.memory_space<vmem>>, vector<16x128xbf16>
    tpu.vector_store %arg5[%c0_5, %c0_6], %7 {strides = array<i32>} : memref<16x128xbf16, #tpu.memory_space<vmem>>, vector<16x128xbf16>,
    return
  }
  func.func @transform_0(%arg0: i32, %arg1: i32) -> (i32, i32) {
    %c0_i32 = arith.constant 0 : i32
    %c0_i32_0 = arith.constant 0 : i32
    return %arg1, %c0_i32 : i32, i32
  }
  func.func @transform_1(%arg0: i32, %arg1: i32) -> (i32, i32) {
    %c0_i32 = arith.constant 0 : i32
    %c0_i32_0 = arith.constant 0 : i32
    return %c0_i32, %arg0 : i32, i32
  }
  func.func @transform_2(%arg0: i32, %arg1: i32) -> (i32, i32) {
    %c0_i32 = arith.constant 0 : i32
    %c0_i32_0 = arith.constant 0 : i32
    return %c0_i32, %arg0 : i32, i32
  }
  func.func @transform_3(%arg0: i32, %arg1: i32) -> (i32, i32) {
    %c0_i32 = arith.constant 0 : i32
    return %arg1, %arg0 : i32, i32
  }
}

module attributes {stable_mosaic.version = 11 : i64} {
  func.func @_attn_kernel(%arg0: i32, %arg1: i32, %arg2: memref<1x4x8x8xbf16, #tpu.memory_space<vmem>>, %arg3: memref<1x4x8x8xbf16, #tpu.memory_space<vmem>>, %arg4: memref<1x4x8x8xbf16, #tpu.memory_space<vmem>>, %arg5: memref<1x4x8x8xbf16, #tpu.memory_space<vmem>>) attributes {dimension_semantics = [#tpu.dimension_semantics<parallel>, #tpu.dimension_semantics<parallel>], iteration_bounds = array<i64: 2, 1>, scalar_prefetch = 0 : i64, scratch_operands = 0 : i64, tpu.core_type = #tpu.core_type<tc>, window_params = [{transform_indices = @transform_0, window_bounds = array<i64: 1, 4, 8, 8>}, {transform_indices = @transform_1, window_bounds = array<i64: 1, 4, 8, 8>}, {transform_indices = @transform_2, window_bounds = array<i64: 1, 4, 8, 8>}, {transform_indices = @transform_3, window_bounds = array<i64: 1, 4, 8, 8>}]} {
    %c0 = arith.constant 0 : index
    %c0_0 = arith.constant 0 : index
    %c0_1 = arith.constant 0 : index
    %c0_2 = arith.constant 0 : index
    %0 = vector.load %arg2[%c0, %c0_0, %c0_1, %c0_2] : memref<1x4x8x8xbf16, #tpu.memory_space<vmem>>, vector<1x4x8x8xbf16>
    %1 = vector.shape_cast %0 : vector<1x4x8x8xbf16> to vector<4x8x8xbf16>
    %c0_3 = arith.constant 0 : index
    %c0_4 = arith.constant 0 : index
    %c0_5 = arith.constant 0 : index
    %c0_6 = arith.constant 0 : index
    %2 = vector.load %arg3[%c0_3, %c0_4, %c0_5, %c0_6] : memref<1x4x8x8xbf16, #tpu.memory_space<vmem>>, vector<1x4x8x8xbf16>
    %3 = vector.shape_cast %2 : vector<1x4x8x8xbf16> to vector<4x8x8xbf16>
    %c0_7 = arith.constant 0 : index
    %c0_8 = arith.constant 0 : index
    %c0_9 = arith.constant 0 : index
    %c0_10 = arith.constant 0 : index
    %4 = vector.load %arg4[%c0_7, %c0_8, %c0_9, %c0_10] : memref<1x4x8x8xbf16, #tpu.memory_space<vmem>>, vector<1x4x8x8xbf16>
    %5 = vector.shape_cast %4 : vector<1x4x8x8xbf16> to vector<4x8x8xbf16>
    %cst = arith.constant dense<0.000000e+00> : vector<4x8x8xf32>
    %6 = tpu.matmul %1, %3, %cst {dimension_numbers = #tpu.dot_dimension_numbers<[2], [2], [1], [1], [0, 0, 0, 1, 1, 1], [0], [0]>} : vector<4x8x8xbf16>, vector<4x8x8xbf16>, vector<4x8x8xf32> -> vector<4x8x8xf32>
    %cst_11 = arith.constant 0.353553385 : f32
    %7 = vector.broadcast %cst_11 : f32 to vector<4x8x8xf32>
    %8 = arith.mulf %6, %7 : vector<4x8x8xf32>
    %cst_12 = arith.constant dense<0xFF800000> : vector<4x8xf32>
    %9 = vector.multi_reduction <maximumf>, %8, %cst_12 [2] : vector<4x8x8xf32> to vector<4x8xf32>
    %10 = vector.shape_cast %9 : vector<4x8xf32> to vector<4x8x1xf32>
    %11 = vector.broadcast %10 : vector<4x8x1xf32> to vector<4x8x8xf32>
    %12 = arith.subf %8, %11 : vector<4x8x8xf32>
    %13 = math.exp %12 : vector<4x8x8xf32>
    %cst_13 = arith.constant dense<0.000000e+00> : vector<4x8xf32>
    %14 = vector.multi_reduction <add>, %13, %cst_13 [2] : vector<4x8x8xf32> to vector<4x8xf32>
    %15 = vector.shape_cast %14 : vector<4x8xf32> to vector<4x8x1xf32>
    %16 = tpu.reciprocal %15 {approx = true} : vector<4x8x1xf32> -> vector<4x8x1xf32>
    %17 = vector.broadcast %16 : vector<4x8x1xf32> to vector<4x8x8xf32>
    %18 = arith.mulf %13, %17 : vector<4x8x8xf32>
    %19 = arith.truncf %18 : vector<4x8x8xf32> to vector<4x8x8xbf16>
    %cst_14 = arith.constant dense<0.000000e+00> : vector<4x8x8xf32>
    %20 = tpu.matmul %19, %5, %cst_14 {dimension_numbers = #tpu.dot_dimension_numbers<[2], [1], [1], [2], [0, 0, 0, 1, 1, 2], [0], [0]>} : vector<4x8x8xbf16>, vector<4x8x8xbf16>, vector<4x8x8xf32> -> vector<4x8x8xf32>
    %21 = arith.truncf %20 : vector<4x8x8xf32> to vector<4x8x8xbf16>
    %c0_15 = arith.constant 0 : index
    %c0_16 = arith.constant 0 : index
    %c0_17 = arith.constant 0 : index
    %c0_18 = arith.constant 0 : index
    %22 = vector.load %arg5[%c0_15, %c0_16, %c0_17, %c0_18] : memref<1x4x8x8xbf16, #tpu.memory_space<vmem>>, vector<1x4x8x8xbf16>
    %23 = vector.shape_cast %22 : vector<1x4x8x8xbf16> to vector<4x8x8xbf16>
    %24 = vector.shape_cast %21 : vector<4x8x8xbf16> to vector<1x4x8x8xbf16>
    tpu.vector_store %arg5[%c0_15, %c0_16, %c0_17, %c0_18], %24 {strides = array<i32>} : memref<1x4x8x8xbf16, #tpu.memory_space<vmem>>, vector<1x4x8x8xbf16>,
    return
  }
  func.func @transform_0(%arg0: i32, %arg1: i32) -> (i32, i32, i32, i32) {
    %c0_i32 = arith.constant 0 : i32
    %c0_i32_0 = arith.constant 0 : i32
    %c0_i32_1 = arith.constant 0 : i32
    return %arg0, %c0_i32, %arg1, %c0_i32_0 : i32, i32, i32, i32
  }
  func.func @transform_1(%arg0: i32, %arg1: i32) -> (i32, i32, i32, i32) {
    %c0_i32 = arith.constant 0 : i32
    %c0_i32_0 = arith.constant 0 : i32
    %c0_i32_1 = arith.constant 0 : i32
    %c0_i32_2 = arith.constant 0 : i32
    return %arg0, %c0_i32, %c0_i32_0, %c0_i32_1 : i32, i32, i32, i32
  }
  func.func @transform_2(%arg0: i32, %arg1: i32) -> (i32, i32, i32, i32) {
    %c0_i32 = arith.constant 0 : i32
    %c0_i32_0 = arith.constant 0 : i32
    %c0_i32_1 = arith.constant 0 : i32
    %c0_i32_2 = arith.constant 0 : i32
    return %arg0, %c0_i32, %c0_i32_0, %c0_i32_1 : i32, i32, i32, i32
  }
  func.func @transform_3(%arg0: i32, %arg1: i32) -> (i32, i32, i32, i32) {
    %c0_i32 = arith.constant 0 : i32
    %c0_i32_0 = arith.constant 0 : i32
    %c0_i32_1 = arith.constant 0 : i32
    return %arg0, %c0_i32, %arg1, %c0_i32_0 : i32, i32, i32, i32
  }
}

module attributes {stable_mosaic.version = 11 : i64} {
  func.func @_ffn_add_ln_kernel(%arg0: i32, %arg1: memref<16x32xf32, #tpu.memory_space<vmem>>, %arg2: memref<32x64xbf16, #tpu.memory_space<vmem>>, %arg3: memref<1x64xf32, #tpu.memory_space<vmem>>, %arg4: memref<64x32xbf16, #tpu.memory_space<vmem>>, %arg5: memref<1x32xf32, #tpu.memory_space<vmem>>, %arg6: memref<1x32xf32, #tpu.memory_space<vmem>>, %arg7: memref<1x32xf32, #tpu.memory_space<vmem>>, %arg8: memref<16x32xf32, #tpu.memory_space<vmem>>) attributes {dimension_semantics = [#tpu.dimension_semantics<parallel>], iteration_bounds = array<i64: 1>, scalar_prefetch = 0 : i64, scratch_operands = 0 : i64, tpu.core_type = #tpu.core_type<tc>, window_params = [{transform_indices = @transform_0, window_bounds = array<i64: 16, 32>}, {pipeline_mode = #tpu.pipeline_mode<synchronous>, transform_indices = @transform_1, window_bounds = array<i64: 32, 64>}, {pipeline_mode = #tpu.pipeline_mode<synchronous>, transform_indices = @transform_2, window_bounds = array<i64: 1, 64>}, {pipeline_mode = #tpu.pipeline_mode<synchronous>, transform_indices = @transform_3, window_bounds = array<i64: 64, 32>}, {pipeline_mode = #tpu.pipeline_mode<synchronous>, transform_indices = @transform_4, window_bounds = array<i64: 1, 32>}, {pipeline_mode = #tpu.pipeline_mode<synchronous>, transform_indices = @transform_5, window_bounds = array<i64: 1, 32>}, {pipeline_mode = #tpu.pipeline_mode<synchronous>, transform_indices = @transform_6, window_bounds = array<i64: 1, 32>}, {transform_indices = @transform_7, window_bounds = array<i64: 16, 32>}]} {
    %c0 = arith.constant 0 : index
    %c0_0 = arith.constant 0 : index
    %0 = vector.load %arg1[%c0, %c0_0] : memref<16x32xf32, #tpu.memory_space<vmem>>, vector<16x32xf32>
    %1 = arith.truncf %0 : vector<16x32xf32> to vector<16x32xbf16>
    %c0_1 = arith.constant 0 : index
    %c0_2 = arith.constant 0 : index
    %2 = vector.load %arg2[%c0_1, %c0_2] : memref<32x64xbf16, #tpu.memory_space<vmem>>, vector<32x64xbf16>
    %cst = arith.constant dense<0.000000e+00> : vector<16x64xf32>
    %3 = tpu.matmul %1, %2, %cst {dimension_numbers = #tpu.dot_dimension_numbers<[1], [0], [0], [1], [0, 0, 1, 1], [], []>} : vector<16x32xbf16>, vector<32x64xbf16>, vector<16x64xf32> -> vector<16x64xf32>
    %c0_3 = arith.constant 0 : index
    %c0_4 = arith.constant 0 : index
    %4 = vector.load %arg3[%c0_3, %c0_4] : memref<1x64xf32, #tpu.memory_space<vmem>>, vector<1x64xf32>
    %5 = vector.broadcast %4 : vector<1x64xf32> to vector<16x64xf32>
    %6 = arith.addf %3, %5 : vector<16x64xf32>
    %cst_5 = arith.constant 0.000000e+00 : f32
    %7 = vector.broadcast %cst_5 : f32 to vector<16x64xf32>
    %8 = arith.maximumf %6, %7 : vector<16x64xf32>
    %9 = arith.truncf %8 : vector<16x64xf32> to vector<16x64xbf16>
    %c0_6 = arith.constant 0 : index
    %c0_7 = arith.constant 0 : index
    %10 = vector.load %arg4[%c0_6, %c0_7] : memref<64x32xbf16, #tpu.memory_space<vmem>>, vector<64x32xbf16>
    %cst_8 = arith.constant dense<0.000000e+00> : vector<16x32xf32>
    %11 = tpu.matmul %9, %10, %cst_8 {dimension_numbers = #tpu.dot_dimension_numbers<[1], [0], [0], [1], [0, 0, 1, 1], [], []>} : vector<16x64xbf16>, vector<64x32xbf16>, vector<16x32xf32> -> vector<16x32xf32>
    %c0_9 = arith.constant 0 : index
    %c0_10 = arith.constant 0 : index
    %12 = vector.load %arg5[%c0_9, %c0_10] : memref<1x32xf32, #tpu.memory_space<vmem>>, vector<1x32xf32>
    %13 = vector.broadcast %12 : vector<1x32xf32> to vector<16x32xf32>
    %14 = arith.addf %11, %13 : vector<16x32xf32>
    %15 = arith.addf %14, %0 : vector<16x32xf32>
    %c0_11 = arith.constant 0 : index
    %c0_12 = arith.constant 0 : index
    %16 = vector.load %arg6[%c0_11, %c0_12] : memref<1x32xf32, #tpu.memory_space<vmem>>, vector<1x32xf32>
    %c0_13 = arith.constant 0 : index
    %c0_14 = arith.constant 0 : index
    %17 = vector.load %arg7[%c0_13, %c0_14] : memref<1x32xf32, #tpu.memory_space<vmem>>, vector<1x32xf32>
    %cst_15 = arith.constant dense<0.000000e+00> : vector<16xf32>
    %18 = vector.multi_reduction <add>, %15, %cst_15 [1] : vector<16x32xf32> to vector<16xf32>
    %19 = vector.shape_cast %18 : vector<16xf32> to vector<16x1xf32>
    %cst_16 = arith.constant 3.200000e+01 : f32
    %20 = vector.broadcast %cst_16 : f32 to vector<16x1xf32>
    %21 = arith.divf %19, %20 : vector<16x1xf32>
    %22 = vector.broadcast %21 : vector<16x1xf32> to vector<16x32xf32>
    %23 = arith.subf %15, %22 : vector<16x32xf32>
    %24 = arith.mulf %23, %23 : vector<16x32xf32>
    %cst_17 = arith.constant dense<0.000000e+00> : vector<16xf32>
    %25 = vector.multi_reduction <add>, %24, %cst_17 [1] : vector<16x32xf32> to vector<16xf32>
    %26 = vector.shape_cast %25 : vector<16xf32> to vector<16x1xf32>
    %cst_18 = arith.constant 3.200000e+01 : f32
    %27 = vector.broadcast %cst_18 : f32 to vector<16x1xf32>
    %28 = arith.divf %26, %27 : vector<16x1xf32>
    %29 = vector.broadcast %21 : vector<16x1xf32> to vector<16x32xf32>
    %30 = arith.subf %15, %29 : vector<16x32xf32>
    %cst_19 = arith.constant 9.99999974E-6 : f32
    %31 = vector.broadcast %cst_19 : f32 to vector<16x1xf32>
    %32 = arith.addf %28, %31 : vector<16x1xf32>
    %33 = math.rsqrt %32 : vector<16x1xf32>
    %34 = vector.broadcast %33 : vector<16x1xf32> to vector<16x32xf32>
    %35 = arith.mulf %30, %34 : vector<16x32xf32>
    %36 = vector.broadcast %16 : vector<1x32xf32> to vector<16x32xf32>
    %37 = arith.mulf %35, %36 : vector<16x32xf32>
    %38 = vector.broadcast %17 : vector<1x32xf32> to vector<16x32xf32>
    %39 = arith.addf %37, %38 : vector<16x32xf32>
    %c0_20 = arith.constant 0 : index
    %c0_21 = arith.constant 0 : index
    %40 = vector.load %arg8[%c0_20, %c0_21] : memref<16x32xf32, #tpu.memory_space<vmem>>, vector<16x32xf32>
    tpu.vector_store %arg8[%c0_20, %c0_21], %39 {strides = array<i32>} : memref<16x32xf32, #tpu.memory_space<vmem>>, vector<16x32xf32>,
    return
  }
  func.func @transform_0(%arg0: i32) -> (i32, i32) {
    %c0_i32 = arith.constant 0 : i32
    %c0_i32_0 = arith.constant 0 : i32
    return %arg0, %c0_i32 : i32, i32
  }
  func.func @transform_1(%arg0: i32) -> (i32, i32) {
    %c0_i32 = arith.constant 0 : i32
    %c0_i32_0 = arith.constant 0 : i32
    %c0_i32_1 = arith.constant 0 : i32
    return %c0_i32, %c0_i32_0 : i32, i32
  }
  func.func @transform_2(%arg0: i32) -> (i32, i32) {
    %c0_i32 = arith.constant 0 : i32
    %c0_i32_0 = arith.constant 0 : i32
    %c0_i32_1 = arith.constant 0 : i32
    return %c0_i32, %c0_i32_0 : i32, i32
  }
  func.func @transform_3(%arg0: i32) -> (i32, i32) {
    %c0_i32 = arith.constant 0 : i32
    %c0_i32_0 = arith.constant 0 : i32
    %c0_i32_1 = arith.constant 0 : i32
    return %c0_i32, %c0_i32_0 : i32, i32
  }
  func.func @transform_4(%arg0: i32) -> (i32, i32) {
    %c0_i32 = arith.constant 0 : i32
    %c0_i32_0 = arith.constant 0 : i32
    %c0_i32_1 = arith.constant 0 : i32
    return %c0_i32, %c0_i32_0 : i32, i32
  }
  func.func @transform_5(%arg0: i32) -> (i32, i32) {
    %c0_i32 = arith.constant 0 : i32
    %c0_i32_0 = arith.constant 0 : i32
    %c0_i32_1 = arith.constant 0 : i32
    return %c0_i32, %c0_i32_0 : i32, i32
  }
  func.func @transform_6(%arg0: i32) -> (i32, i32) {
    %c0_i32 = arith.constant 0 : i32
    %c0_i32_0 = arith.constant 0 : i32
    %c0_i32_1 = arith.constant 0 : i32
    return %c0_i32, %c0_i32_0 : i32, i32
  }
  func.func @transform_7(%arg0: i32) -> (i32, i32) {
    %c0_i32 = arith.constant 0 : i32
    %c0_i32_0 = arith.constant 0 : i32
    return %arg0, %c0_i32 : i32, i32
  }
}

module attributes {stable_mosaic.version = 11 : i64} {
  func.func @_linear_kernel(%arg0: i32, %arg1: i32, %arg2: memref<16x32xf32, #tpu.memory_space<vmem>>, %arg3: memref<32x128xbf16, #tpu.memory_space<vmem>>, %arg4: memref<1x128xf32, #tpu.memory_space<vmem>>, %arg5: memref<16x128xf32, #tpu.memory_space<vmem>>) attributes {dimension_semantics = [#tpu.dimension_semantics<parallel>, #tpu.dimension_semantics<parallel>], iteration_bounds = array<i64: 1, 1>, scalar_prefetch = 0 : i64, scratch_operands = 0 : i64, tpu.core_type = #tpu.core_type<tc>, window_params = [{transform_indices = @transform_0, window_bounds = array<i64: 16, 32>}, {transform_indices = @transform_1, window_bounds = array<i64: 32, 128>}, {transform_indices = @transform_2, window_bounds = array<i64: 1, 128>}, {transform_indices = @transform_3, window_bounds = array<i64: 16, 128>}]} {
    %c0 = arith.constant 0 : index
    %c0_0 = arith.constant 0 : index
    %0 = vector.load %arg2[%c0, %c0_0] : memref<16x32xf32, #tpu.memory_space<vmem>>, vector<16x32xf32>
    %1 = arith.truncf %0 : vector<16x32xf32> to vector<16x32xbf16>
    %c0_1 = arith.constant 0 : index
    %c0_2 = arith.constant 0 : index
    %2 = vector.load %arg3[%c0_1, %c0_2] : memref<32x128xbf16, #tpu.memory_space<vmem>>, vector<32x128xbf16>
    %cst = arith.constant dense<0.000000e+00> : vector<16x128xf32>
    %3 = tpu.matmul %1, %2, %cst {dimension_numbers = #tpu.dot_dimension_numbers<[1], [0], [0], [1], [0, 0, 1, 1], [], []>} : vector<16x32xbf16>, vector<32x128xbf16>, vector<16x128xf32> -> vector<16x128xf32>
    %c0_3 = arith.constant 0 : index
    %c0_4 = arith.constant 0 : index
    %4 = vector.load %arg4[%c0_3, %c0_4] : memref<1x128xf32, #tpu.memory_space<vmem>>, vector<1x128xf32>
    %5 = vector.broadcast %4 : vector<1x128xf32> to vector<16x128xf32>
    %6 = arith.addf %3, %5 : vector<16x128xf32>
    %c0_5 = arith.constant 0 : index
    %c0_6 = arith.constant 0 : index
    %7 = vector.load %arg5[%c0_5, %c0_6] : memref<16x128xf32, #tpu.memory_space<vmem>>, vector<16x128xf32>
    tpu.vector_store %arg5[%c0_5, %c0_6], %6 {strides = array<i32>} : memref<16x128xf32, #tpu.memory_space<vmem>>, vector<16x128xf32>,
    return
  }
  func.func @transform_0(%arg0: i32, %arg1: i32) -> (i32, i32) {
    %c0_i32 = arith.constant 0 : i32
    %c0_i32_0 = arith.constant 0 : i32
    return %arg1, %c0_i32 : i32, i32
  }
  func.func @transform_1(%arg0: i32, %arg1: i32) -> (i32, i32) {
    %c0_i32 = arith.constant 0 : i32
    %c0_i32_0 = arith.constant 0 : i32
    return %c0_i32, %arg0 : i32, i32
  }
  func.func @transform_2(%arg0: i32, %arg1: i32) -> (i32, i32) {
    %c0_i32 = arith.constant 0 : i32
    %c0_i32_0 = arith.constant 0 : i32
    return %c0_i32, %arg0 : i32, i32
  }
  func.func @transform_3(%arg0: i32, %arg1: i32) -> (i32, i32) {
    %c0_i32 = arith.constant 0 : i32
    return %arg1, %arg0 : i32, i32
  }
}

module attributes {stable_mosaic.version = 11 : i64} {
  func.func @_ln_kernel(%arg0: i32, %arg1: memref<16x32xf32, #tpu.memory_space<vmem>>, %arg2: memref<1x32xf32, #tpu.memory_space<vmem>>, %arg3: memref<1x32xf32, #tpu.memory_space<vmem>>, %arg4: memref<16x32xf32, #tpu.memory_space<vmem>>) attributes {dimension_semantics = [#tpu.dimension_semantics<parallel>], iteration_bounds = array<i64: 1>, scalar_prefetch = 0 : i64, scratch_operands = 0 : i64, tpu.core_type = #tpu.core_type<tc>, window_params = [{transform_indices = @transform_0, window_bounds = array<i64: 16, 32>}, {pipeline_mode = #tpu.pipeline_mode<synchronous>, transform_indices = @transform_1, window_bounds = array<i64: 1, 32>}, {pipeline_mode = #tpu.pipeline_mode<synchronous>, transform_indices = @transform_2, window_bounds = array<i64: 1, 32>}, {transform_indices = @transform_3, window_bounds = array<i64: 16, 32>}]} {
    %c0 = arith.constant 0 : index
    %c0_0 = arith.constant 0 : index
    %0 = vector.load %arg1[%c0, %c0_0] : memref<16x32xf32, #tpu.memory_space<vmem>>, vector<16x32xf32>
    %c0_1 = arith.constant 0 : index
    %c0_2 = arith.constant 0 : index
    %1 = vector.load %arg2[%c0_1, %c0_2] : memref<1x32xf32, #tpu.memory_space<vmem>>, vector<1x32xf32>
    %c0_3 = arith.constant 0 : index
    %c0_4 = arith.constant 0 : index
    %2 = vector.load %arg3[%c0_3, %c0_4] : memref<1x32xf32, #tpu.memory_space<vmem>>, vector<1x32xf32>
    %cst = arith.constant dense<0.000000e+00> : vector<16xf32>
    %3 = vector.multi_reduction <add>, %0, %cst [1] : vector<16x32xf32> to vector<16xf32>
    %4 = vector.shape_cast %3 : vector<16xf32> to vector<16x1xf32>
    %cst_5 = arith.constant 3.200000e+01 : f32
    %5 = vector.broadcast %cst_5 : f32 to vector<16x1xf32>
    %6 = arith.divf %4, %5 : vector<16x1xf32>
    %7 = vector.broadcast %6 : vector<16x1xf32> to vector<16x32xf32>
    %8 = arith.subf %0, %7 : vector<16x32xf32>
    %9 = arith.mulf %8, %8 : vector<16x32xf32>
    %cst_6 = arith.constant dense<0.000000e+00> : vector<16xf32>
    %10 = vector.multi_reduction <add>, %9, %cst_6 [1] : vector<16x32xf32> to vector<16xf32>
    %11 = vector.shape_cast %10 : vector<16xf32> to vector<16x1xf32>
    %cst_7 = arith.constant 3.200000e+01 : f32
    %12 = vector.broadcast %cst_7 : f32 to vector<16x1xf32>
    %13 = arith.divf %11, %12 : vector<16x1xf32>
    %14 = vector.broadcast %6 : vector<16x1xf32> to vector<16x32xf32>
    %15 = arith.subf %0, %14 : vector<16x32xf32>
    %cst_8 = arith.constant 9.99999974E-6 : f32
    %16 = vector.broadcast %cst_8 : f32 to vector<16x1xf32>
    %17 = arith.addf %13, %16 : vector<16x1xf32>
    %18 = math.rsqrt %17 : vector<16x1xf32>
    %19 = vector.broadcast %18 : vector<16x1xf32> to vector<16x32xf32>
    %20 = arith.mulf %15, %19 : vector<16x32xf32>
    %21 = vector.broadcast %1 : vector<1x32xf32> to vector<16x32xf32>
    %22 = arith.mulf %20, %21 : vector<16x32xf32>
    %23 = vector.broadcast %2 : vector<1x32xf32> to vector<16x32xf32>
    %24 = arith.addf %22, %23 : vector<16x32xf32>
    %c0_9 = arith.constant 0 : index
    %c0_10 = arith.constant 0 : index
    %25 = vector.load %arg4[%c0_9, %c0_10] : memref<16x32xf32, #tpu.memory_space<vmem>>, vector<16x32xf32>
    tpu.vector_store %arg4[%c0_9, %c0_10], %24 {strides = array<i32>} : memref<16x32xf32, #tpu.memory_space<vmem>>, vector<16x32xf32>,
    return
  }
  func.func @transform_0(%arg0: i32) -> (i32, i32) {
    %c0_i32 = arith.constant 0 : i32
    %c0_i32_0 = arith.constant 0 : i32
    return %arg0, %c0_i32 : i32, i32
  }
  func.func @transform_1(%arg0: i32) -> (i32, i32) {
    %c0_i32 = arith.constant 0 : i32
    %c0_i32_0 = arith.constant 0 : i32
    %c0_i32_1 = arith.constant 0 : i32
    return %c0_i32, %c0_i32_0 : i32, i32
  }
  func.func @transform_2(%arg0: i32) -> (i32, i32) {
    %c0_i32 = arith.constant 0 : i32
    %c0_i32_0 = arith.constant 0 : i32
    %c0_i32_1 = arith.constant 0 : i32
    return %c0_i32, %c0_i32_0 : i32, i32
  }
  func.func @transform_3(%arg0: i32) -> (i32, i32) {
    %c0_i32 = arith.constant 0 : i32
    %c0_i32_0 = arith.constant 0 : i32
    return %arg0, %c0_i32 : i32, i32
  }
}

</mosaic_0001>

<llo_original>
// kernel: _lambda_.38
$region0: #{_lambda_.38}
  #allocation0 [shape = 'u32[]', space=smem, size = 0x4, offset = 0x4, fixed_abs, tag = 'smem constant byte address 0x4 - core index']
  #allocation1 [shape = 'u32[144,128]{1,0:T(1,128)}', space=vmem, size = 0x12000, scoped, tag = 'internal scratch']
  %s0 = inlined_call_operand.vmem [shape: bf16[16,32], index: 0, kind: input, shape index: {}]
  %s1 = inlined_call_operand.vmem [shape: bf16[32,32], index: 1, kind: input, shape index: {}]
  %s2 = inlined_call_operand.vmem [shape: f32[1,32], index: 2, kind: input, shape index: {}, may-alias: {2,5}]
  %s3 = inlined_call_operand.vmem [shape: f32[16,32], index: 3, kind: input, shape index: {}]
  %s4 = inlined_call_operand.vmem [shape: f32[1,32], index: 4, kind: input, shape index: {}]
  %s5 = inlined_call_operand.vmem [shape: f32[1,32], index: 5, kind: input, shape index: {}, may-alias: {2,5}]
  %s6 = inlined_call_operand.vmem [shape: f32[16,32], index: 6, kind: output, shape index: {}]
  %s7 = sld [smem:[#allocation0]]
  $region34: #{_lambda_.38} parent=0
    _
  %s9 = ssub.s32 1, %s7
  %s10 = scalar_select 0, %s9, %s7
  // Predicated region
  $region2: #{_lambda_.38} parent=0 // pred_check
    _
  $region3: #{_lambda_.38} parent=0 // pred_check_branch
    %12 = sbr.rel (0) target = $region5
  $region4: #{_lambda_.38} parent=0 // pred_region
    _
  $region5: #{_lambda_.38} parent=0 // pred_fallthru
    _
  // Predicated region
  $region6: #{_lambda_.38} parent=0 // pred_check
    _
  $region7: #{_lambda_.38} parent=0 // pred_check_branch
    %14 = sbr.rel (0) target = $region9
  $region8: #{_lambda_.38} parent=0 // pred_region
    _
  $region9: #{_lambda_.38} parent=0 // pred_fallthru
    _
  // Predicated region
  $region10: #{_lambda_.38} parent=0 // pred_check
    _
  $region11: #{_lambda_.38} parent=0 // pred_check_branch
    %16 = sbr.rel (0) target = $region13
  $region12: #{_lambda_.38} parent=0 // pred_region
    _
  $region13: #{_lambda_.38} parent=0 // pred_fallthru
    _
  // Predicated region
  $region14: #{_lambda_.38} parent=0 // pred_check
    _
  $region15: #{_lambda_.38} parent=0 // pred_check_branch
    %18 = sbr.rel (0) target = $region17
  $region16: #{_lambda_.38} parent=0 // pred_region
    _
  $region17: #{_lambda_.38} parent=0 // pred_fallthru
    _
  // Predicated region
  $region18: #{_lambda_.38} parent=0 // pred_check
    _
  $region19: #{_lambda_.38} parent=0 // pred_check_branch
    %20 = sbr.rel (0) target = $region21
  $region20: #{_lambda_.38} parent=0 // pred_region
    _
  $region21: #{_lambda_.38} parent=0 // pred_fallthru
    _
  // Predicated region
  $region22: #{_lambda_.38} parent=0 // pred_check
    _
  $region23: #{_lambda_.38} parent=0 // pred_check_branch
    %22 = sbr.rel (0) target = $region25
  $region24: #{_lambda_.38} parent=0 // pred_region
    _
  $region25: #{_lambda_.38} parent=0 // pred_fallthru
    _
  %v24 = vld [vmem:[%s0] sm:$0xf]
  %v25 = vld [vmem:[%s0 + $0x4] sm:$0xf]
  %v26 = vld [vmem:[%s1] sm:$0xf]
  %v27 = vld [vmem:[%s1 + $0x4] sm:$0xf]
  %v28 = vld [vmem:[%s1 + $0x8] sm:$0xf]
  %v29 = vld [vmem:[%s1 + $0xc] sm:$0xf]
  %v30 = vld [vmem:[%s2] sm:$0x1]
  %v32 = vlaneseq
  %v33 = vshrl.u32 %v32, 7
  %v34 = vsub.s32 0, %v33
  %v35 = vrot.slane %v30, %v34
  %v39 = vunpack.c.l.b16 %v24
  %v40 = vunpack.c.l.b16 %v25
  %v41 = vpack.c.b16 %v40, %v39
  %v46 = vunpack.c.l.b16 %v26
  %v47 = vunpack.c.l.b16 %v27
  %v48 = vunpack.c.l.b16 %v28
  %v49 = vunpack.c.l.b16 %v29
  %v50 = vpack.c.b16 %v47, %v46
  %v51 = vpack.c.b16 %v49, %v48
  %vm54 = vcmask 261120
  %v56 = vsel %vm54, %v41, 0
  %58 = vmatprep.subr.bf16.mxu0 0
  %59 = vmatpush1.bf16.msra.mxu0 %v50
  %60 = vmatprep.subr.bf16.mxu0 0
  %61 = vmatpush1.bf16.msra.mxu0 %v51
  %62 = vmatprep.subr.bf16.mxu0 0
  %63 = vmatpush1.bf16.msra.mxu0 0
  %64 = vmatprep.subr.bf16.mxu0 0
  %65 = vmatpush1.bf16.msra.mxu0 0
  %66 = vmatprep.subr.bf16.mxu0 0
  %67 = vmatpush1.bf16.msra.mxu0 0
  %68 = vmatprep.subr.bf16.mxu0 0
  %69 = vmatpush1.bf16.msra.mxu0 0
  %70 = vmatprep.subr.bf16.mxu0 0
  %71 = vmatpush1.bf16.msra.mxu0 0
  %72 = vmatprep.subr.bf16.mxu0 0
  %73 = vmatpush1.bf16.msra.mxu0 0
  %74 = vmatprep.subr.bf16.mxu0 0
  %75 = vmatpush1.bf16.msra.mxu0 0
  %76 = vmatprep.subr.bf16.mxu0 0
  %77 = vmatpush1.bf16.msra.mxu0 0
  %78 = vmatprep.subr.bf16.mxu0 0
  %79 = vmatpush1.bf16.msra.mxu0 0
  %80 = vmatprep.subr.bf16.mxu0 0
  %81 = vmatpush1.bf16.msra.mxu0 0
  %82 = vmatprep.subr.bf16.mxu0 0
  %83 = vmatpush1.bf16.msra.mxu0 0
  %84 = vmatprep.subr.bf16.mxu0 0
  %85 = vmatpush1.bf16.msra.mxu0 0
  %86 = vmatprep.subr.bf16.mxu0 0
  %87 = vmatpush1.bf16.msra.mxu0 0
  %88 = vmatprep.subr.bf16.mxu0 0
  %89 = vmatpush1.bf16.msra.mxu0 0
  %90 = vmatprep.mubr.bf16.mxu0 0
  %91 = vmatmul.mubr.bf16.gmra.mrb[0].mxu0 %v56
  %v92 = vpop.f32.mrb[0].mxu0
  %v93 = vadd.f32 %v35, %v92
  %v94 = vpop.f32.mrb[0].mxu0
  %v95 = vpop.f32.mrb[0].mxu0
  %v96 = vadd.f32 %v35, %v95
  %v97 = vpop.f32.mrb[0].mxu0
  %98 = vdwg.mxu0
  %v99 = vld [vmem:[%s3] sm:$0xff]
  %v100 = vld [vmem:[%s3 + $0x8] sm:$0xff]
  %v101 = vadd.f32 %v93, %v99
  %v102 = vadd.f32 %v96, %v100
  %v103 = vld [vmem:[%s4] sm:$0x1]
  %v104 = vld [vmem:[%s5] sm:$0x1]
  %v105 = vsel %vm54, %v101, 0.0
  %106 = vadd.xlane.f32.xlu0 %v105
  %v107 = vpop.xlane.xlu0 %106
  %v108 = vsel %vm54, %v102, 0.0
  %109 = vadd.xlane.f32.xlu0 %v108
  %v110 = vpop.xlane.xlu0 %109
  %v111 = vrcp.pop 32.0
  %v112 = vmul.f32 %v107, %v111
  %v113 = vmul.f32 %v110, %v111
  %v114 = vsub.f32 %v101, %v112
  %v115 = vsub.f32 %v102, %v113
  %v116 = vmul.f32 %v114, %v114
  %v117 = vmul.f32 %v115, %v115
  %v118 = vsel %vm54, %v116, 0.0
  %119 = vadd.xlane.f32.xlu0 %v118
  %v120 = vpop.xlane.xlu0 %119
  %v121 = vsel %vm54, %v117, 0.0
  %122 = vadd.xlane.f32.xlu0 %v121
  %v123 = vpop.xlane.xlu0 %122
  %v124 = vmul.f32 %v120, %v111
  %v125 = vmul.f32 %v123, %v111
  %v126 = vadd.f32 %v124, 1e-05
  %v127 = vadd.f32 %v125, 1e-05
  %v128 = vrsqrt.pop %v126
  %v129 = vrsqrt.pop %v127
  %v130 = vmul.f32 %v114, %v128
  %v131 = vmul.f32 %v115, %v129
  %v133 = vlaneseq
  %v134 = vshrl.u32 %v133, 7
  %v135 = vsub.s32 0, %v134
  %v136 = vrot.slane %v103, %v135
  %v138 = vmul.f32 %v130, %v136
  %v139 = vmul.f32 %v131, %v136
  %v141 = vlaneseq
  %v142 = vshrl.u32 %v141, 7
  %v143 = vsub.s32 0, %v142
  %v144 = vrot.slane %v104, %v143
  %v146 = vadd.f32 %v138, %v144
  %v147 = vadd.f32 %v139, %v144
  %148 = vst.msk [vmem:[%s6] sm:$0xff] %vm54, %v146
  %149 = vst.msk [vmem:[%s6 + $0x8] sm:$0xff] %vm54, %v147
  // Predicated region
  $region26: #{_lambda_.38} parent=0 // pred_check
    _
  $region27: #{_lambda_.38} parent=0 // pred_check_branch
    %151 = sbr.rel (0) target = $region29
  $region28: #{_lambda_.38} parent=0 // pred_region
    _
  $region29: #{_lambda_.38} parent=0 // pred_fallthru
    _
  // Predicated region
  $region30: #{_lambda_.38} parent=0 // pred_check
    _
  $region31: #{_lambda_.38} parent=0 // pred_check_branch
    %153 = sbr.rel (0) target = $region33
  $region32: #{_lambda_.38} parent=0 // pred_region
    _
  $region33: #{_lambda_.38} parent=0 // pred_fallthru
    _

// kernel: _lambda_.36
$region0: #{_lambda_.36}
  #allocation0 [shape = 'u32[]', space=smem, size = 0x4, offset = 0x4, fixed_abs, tag = 'smem constant byte address 0x4 - core index']
  #allocation1 [shape = 'u32[144,128]{1,0:T(1,128)}', space=vmem, size = 0x12000, scoped, tag = 'internal scratch']
  %s0 = inlined_call_operand.vmem [shape: f32[16,32], index: 0, kind: input, shape index: {}]
  %s1 = inlined_call_operand.vmem [shape: bf16[32,128], index: 1, kind: input, shape index: {}]
  %s2 = inlined_call_operand.vmem [shape: f32[1,128], index: 2, kind: input, shape index: {}]
  %s3 = inlined_call_operand.vmem [shape: bf16[16,128], index: 3, kind: output, shape index: {}]
  %s4 = sld [smem:[#allocation0]]
  $region22: #{_lambda_.36} parent=0
    _
  %s6 = ssub.s32 1, %s4
  %s7 = scalar_select 0, %s6, %s4
  // Predicated region
  $region2: #{_lambda_.36} parent=0 // pred_check
    _
  $region3: #{_lambda_.36} parent=0 // pred_check_branch
    %9 = sbr.rel (0) target = $region5
  $region4: #{_lambda_.36} parent=0 // pred_region
    _
  $region5: #{_lambda_.36} parent=0 // pred_fallthru
    _
  // Predicated region
  $region6: #{_lambda_.36} parent=0 // pred_check
    _
  $region7: #{_lambda_.36} parent=0 // pred_check_branch
    %11 = sbr.rel (0) target = $region9
  $region8: #{_lambda_.36} parent=0 // pred_region
    _
  $region9: #{_lambda_.36} parent=0 // pred_fallthru
    _
  // Predicated region
  $region10: #{_lambda_.36} parent=0 // pred_check
    _
  $region11: #{_lambda_.36} parent=0 // pred_check_branch
    %13 = sbr.rel (0) target = $region13
  $region12: #{_lambda_.36} parent=0 // pred_region
    _
  $region13: #{_lambda_.36} parent=0 // pred_fallthru
    _
  %v15 = vld [vmem:[%s0] sm:$0xff]
  %v16 = vld [vmem:[%s0 + $0x8] sm:$0xff]
  %v17 = vpack.c.bf16 %v16, %v15
  %v18 = vld [vmem:[%s1] sm:$0xf]
  %v19 = vld [vmem:[%s1 + $0x4] sm:$0xf]
  %v20 = vld [vmem:[%s1 + $0x8] sm:$0xf]
  %v21 = vld [vmem:[%s1 + $0xc] sm:$0xf]
  %v22 = vld [vmem:[%s2] sm:$0x1]
  %v24 = vlaneseq
  %v25 = vshrl.u32 %v24, 7
  %v26 = vsub.s32 0, %v25
  %v27 = vrot.slane %v22, %v26
  %v33 = vunpack.c.l.b16 %v18
  %v34 = vunpack.c.l.b16 %v19
  %v35 = vunpack.c.l.b16 %v20
  %v36 = vunpack.c.l.b16 %v21
  %v37 = vpack.c.b16 %v34, %v33
  %v38 = vpack.c.b16 %v36, %v35
  %vm41 = vcmask 261120
  %v43 = vsel %vm41, %v17, 0
  %45 = vmatprep.subr.bf16.mxu0 0
  %46 = vmatpush1.bf16.msra.mxu0 %v37
  %47 = vmatprep.subr.bf16.mxu0 0
  %48 = vmatpush1.bf16.msra.mxu0 %v38
  %49 = vmatprep.subr.bf16.mxu0 0
  %50 = vmatpush1.bf16.msra.mxu0 0
  %51 = vmatprep.subr.bf16.mxu0 0
  %52 = vmatpush1.bf16.msra.mxu0 0
  %53 = vmatprep.subr.bf16.mxu0 0
  %54 = vmatpush1.bf16.msra.mxu0 0
  %55 = vmatprep.subr.bf16.mxu0 0
  %56 = vmatpush1.bf16.msra.mxu0 0
  %57 = vmatprep.subr.bf16.mxu0 0
  %58 = vmatpush1.bf16.msra.mxu0 0
  %59 = vmatprep.subr.bf16.mxu0 0
  %60 = vmatpush1.bf16.msra.mxu0 0
  %61 = vmatprep.subr.bf16.mxu0 0
  %62 = vmatpush1.bf16.msra.mxu0 0
  %63 = vmatprep.subr.bf16.mxu0 0
  %64 = vmatpush1.bf16.msra.mxu0 0
  %65 = vmatprep.subr.bf16.mxu0 0
  %66 = vmatpush1.bf16.msra.mxu0 0
  %67 = vmatprep.subr.bf16.mxu0 0
  %68 = vmatpush1.bf16.msra.mxu0 0
  %69 = vmatprep.subr.bf16.mxu0 0
  %70 = vmatpush1.bf16.msra.mxu0 0
  %71 = vmatprep.subr.bf16.mxu0 0
  %72 = vmatpush1.bf16.msra.mxu0 0
  %73 = vmatprep.subr.bf16.mxu0 0
  %74 = vmatpush1.bf16.msra.mxu0 0
  %75 = vmatprep.subr.bf16.mxu0 0
  %76 = vmatpush1.bf16.msra.mxu0 0
  %77 = vmatprep.mubr.bf16.mxu0 0
  %78 = vmatmul.mubr.bf16.gmra.mrb[0].mxu0 %v43
  %v79 = vpop.f32.mrb[0].mxu0
  %v80 = vadd.f32 %v27, %v79
  %v81 = vpop.f32.mrb[0].mxu0
  %v82 = vpop.f32.mrb[0].mxu0
  %v83 = vadd.f32 %v27, %v82
  %v84 = vpop.f32.mrb[0].mxu0
  %85 = vdwg.mxu0
  %v86 = vpack.c.bf16 %v83, %v80
  %v88 = vunpack.c.l.b16 %v86
  %v89 = vunpack.c.h.b16 %v86
  %v90 = vpack.c.b16 %v88, %v88
  %v91 = vpack.c.b16 %v89, %v89
  %94 = vst [vmem:[%s3] sm:$0xf] %v90
  %95 = vst [vmem:[%s3 + $0x4] sm:$0xf] %v91
  // Predicated region
  $region14: #{_lambda_.36} parent=0 // pred_check
    _
  $region15: #{_lambda_.36} parent=0 // pred_check_branch
    %97 = sbr.rel (0) target = $region17
  $region16: #{_lambda_.36} parent=0 // pred_region
    _
  $region17: #{_lambda_.36} parent=0 // pred_fallthru
    _
  // Predicated region
  $region18: #{_lambda_.36} parent=0 // pred_check
    _
  $region19: #{_lambda_.36} parent=0 // pred_check_branch
    %99 = sbr.rel (0) target = $region21
  $region20: #{_lambda_.36} parent=0 // pred_region
    _
  $region21: #{_lambda_.36} parent=0 // pred_fallthru
    _

// kernel: _lambda_.37
$region0: #{_lambda_.37}
  #allocation0 [shape = 'u32[]', space=smem, size = 0x4, offset = 0x4, fixed_abs, tag = 'smem constant byte address 0x4 - core index']
  #allocation1 [shape = 'u32[144,128]{1,0:T(1,128)}', space=vmem, size = 0x12000, scoped, tag = 'internal scratch']
  %s0 = inlined_call_operand.vmem [shape: bf16[2,4,8,8], index: 0, kind: input, shape index: {}]
  %s1 = inlined_call_operand.vmem [shape: bf16[2,4,8,8], index: 1, kind: input, shape index: {}]
  %s2 = inlined_call_operand.vmem [shape: bf16[2,4,8,8], index: 2, kind: input, shape index: {}]
  %s3 = inlined_call_operand.vmem [shape: bf16[2,4,8,8], index: 3, kind: output, shape index: {}]
  %s4 = sld [smem:[#allocation0]]
  $region45: #{_lambda_.37} parent=0
    _
  %s6 = ssub.s32 1, %s4
  %s7 = scalar_select 0, %s6, %s4
  loop: start=0, step=1, limit=4
  $region2: #{_lambda_.37} parent=0 // loop_pre_header
    _
  $region3: #{_lambda_.37} parent=0 // loop_header
    %s9 = sphi 0, %s13
    %p10 = scmp.ge.s32.totalorder %s9, 4
    %s16 = sphi 0, %s28
    %s17 = sphi 0, %s24
    %s18 = sphi 0, %s16
    %s19 = sphi 0, %s17
    %s20 = sphi 0, %s18
    %s21 = sphi 0, %s19
    %s33 = sphi 0, %s35
    %s36 = sphi 0, %s33
    %s37 = sphi 0, %s36
    %s53 = sphi 0, %s37
    %s59 = sphi 0, %s61
    %s62 = sphi 0, %s59
    %s63 = sphi 0, %s62
    %s79 = sphi 0, %s63
    %s85 = sphi 0, %s87
    %s88 = sphi 0, %s85
    %s89 = sphi 0, %s88
    %s105 = sphi 0, %s89
    %s113 = sphi 0, %s115
    %s116 = sphi 0, %s113
    %s117 = sphi 0, %s116
    %s133 = sphi 0, %s117
  $region4: #{_lambda_.37} parent=0 // loop_header_branch
    %12 = sbr.rel (%p10) target = $region8
  $region5: #{_lambda_.37} parent=0 // loop_body
    %s14 = ssub.s32 %s9, 1
    %s15 = ssub.s32 %s9, 2
    %s22 = sadd.s32 1, %s17
    %p23 = scmp.ge.s32.totalorder %s22, 1
    %s24 = scalar_select %p23, 0, %s22
    %s25 = sadd.s32 1, %s16
    %s26 = scalar_select %p23, %s25, %s16
    %p27 = scmp.ge.s32.totalorder %s26, 2
    %s28 = scalar_select %p27, 0, %s26
    %s29 = ssub.s32 %s16, %s28
    %s30 = ssub.s32 %s17, %s24
    %s31 = sor.u32 %s29, %s30
    %p32 = scmp.eq.s32.totalorder %s31, 0
    %s34 = sadd.s32 %s33, 1
    %s35 = scalar_select %p32, %s33, %s34
    %p38 = pneg %p32
    %p39 = scmp.eq.s32.totalorder %s9, 1
    %p40 = por %p38, %p39
    %p41 = scmp.ne.s32.totalorder %s33, %s36
    %p42 = scmp.eq.s32.totalorder %s9, 0
    %p43 = por %p41, %p42
    %p44 = scmp.ne.s32.totalorder %s33, %s36
    %p45 = scmp.eq.s32.totalorder %s14, 1
    %p46 = por %p44, %p45
    %p47 = scmp.ne.s32.totalorder %s36, %s37
    %p48 = scmp.eq.s32.totalorder %s14, 0
    %p49 = por %p47, %p48
    %p50 = scmp.ne.s32.totalorder %s36, %s37
    %p51 = scmp.eq.s32.totalorder %s15, 1
    %p52 = por %p50, %p51
    %p54 = scmp.ne.s32.totalorder %s37, %s53
    %p55 = scmp.eq.s32.totalorder %s15, 0
    %p56 = por %p54, %p55
    %s57 = ssub.s32 %s16, %s28
    %p58 = scmp.eq.s32.totalorder %s57, 0
    %s60 = sadd.s32 %s59, 1
    %s61 = scalar_select %p58, %s59, %s60
    %p64 = pneg %p58
    %p65 = scmp.eq.s32.totalorder %s9, 1
    %p66 = por %p64, %p65
    %p67 = scmp.ne.s32.totalorder %s59, %s62
    %p68 = scmp.eq.s32.totalorder %s9, 0
    %p69 = por %p67, %p68
    %p70 = scmp.ne.s32.totalorder %s59, %s62
    %p71 = scmp.eq.s32.totalorder %s14, 1
    %p72 = por %p70, %p71
    %p73 = scmp.ne.s32.totalorder %s62, %s63
    %p74 = scmp.eq.s32.totalorder %s14, 0
    %p75 = por %p73, %p74
    %p76 = scmp.ne.s32.totalorder %s62, %s63
    %p77 = scmp.eq.s32.totalorder %s15, 1
    %p78 = por %p76, %p77
    %p80 = scmp.ne.s32.totalorder %s63, %s79
    %p81 = scmp.eq.s32.totalorder %s15, 0
    %p82 = por %p80, %p81
    %s83 = ssub.s32 %s16, %s28
    %p84 = scmp.eq.s32.totalorder %s83, 0
    %s86 = sadd.s32 %s85, 1
    %s87 = scalar_select %p84, %s85, %s86
    %p90 = pneg %p84
    %p91 = scmp.eq.s32.totalorder %s9, 1
    %p92 = por %p90, %p91
    %p93 = scmp.ne.s32.totalorder %s85, %s88
    %p94 = scmp.eq.s32.totalorder %s9, 0
    %p95 = por %p93, %p94
    %p96 = scmp.ne.s32.totalorder %s85, %s88
    %p97 = scmp.eq.s32.totalorder %s14, 1
    %p98 = por %p96, %p97
    %p99 = scmp.ne.s32.totalorder %s88, %s89
    %p100 = scmp.eq.s32.totalorder %s14, 0
    %p101 = por %p99, %p100
    %p102 = scmp.ne.s32.totalorder %s88, %s89
    %p103 = scmp.eq.s32.totalorder %s15, 1
    %p104 = por %p102, %p103
    %p106 = scmp.ne.s32.totalorder %s89, %s105
    %p107 = scmp.eq.s32.totalorder %s15, 0
    %p108 = por %p106, %p107
    %s109 = ssub.s32 %s16, %s28
    %s110 = ssub.s32 %s17, %s24
    %s111 = sor.u32 %s109, %s110
    %p112 = scmp.eq.s32.totalorder %s111, 0
    %s114 = sadd.s32 %s113, 1
    %s115 = scalar_select %p112, %s113, %s114
    %p118 = pneg %p112
    %p119 = scmp.eq.s32.totalorder %s9, 1
    %p120 = por %p118, %p119
    %p121 = scmp.ne.s32.totalorder %s113, %s116
    %p122 = scmp.eq.s32.totalorder %s9, 0
    %p123 = por %p121, %p122
    %p124 = scmp.ne.s32.totalorder %s113, %s116
    %p125 = scmp.eq.s32.totalorder %s14, 1
    %p126 = por %p124, %p125
    %p127 = scmp.ne.s32.totalorder %s116, %s117
    %p128 = scmp.eq.s32.totalorder %s14, 0
    %p129 = por %p127, %p128
    %p130 = scmp.ne.s32.totalorder %s116, %s117
    %p131 = scmp.eq.s32.totalorder %s15, 1
    %p132 = por %p130, %p131
    %p134 = scmp.ne.s32.totalorder %s117, %s133
    %p135 = scmp.eq.s32.totalorder %s15, 0
    %p136 = por %p134, %p135
    %p137 = scmp.le.s32.totalorder 1, %s9
    %p138 = scmp.lt.s32.totalorder %s9, 3
    %p139 = pnand %p137, %p138
    %p140 = pneg %p139
    // Predicated region
    $region9: #{_lambda_.37} parent=5 // pred_check
      _
    $region10: #{_lambda_.37} parent=5 // pred_check_branch
      %142 = sbr.rel (%p139) target = $region12
    $region11: #{_lambda_.37} parent=5 // pred_region
      %s143 = ssub.s32 %s9, 1
    $region12: #{_lambda_.37} parent=5 // pred_fallthru
      _
    %p144 = scmp.lt.s32.totalorder %s9, 2
    // Predicated region
    $region13: #{_lambda_.37} parent=5 // pred_check
      %p145 = pneg %p144
    $region14: #{_lambda_.37} parent=5 // pred_check_branch
      %147 = sbr.rel (%p145) target = $region16
    $region15: #{_lambda_.37} parent=5 // pred_region
      // Predicated region
      $region17: #{_lambda_.37} parent=15 // pred_check
        %p148 = pneg %p43
      $region18: #{_lambda_.37} parent=15 // pred_check_branch
        %150 = sbr.rel (%p148) target = $region20
      $region19: #{_lambda_.37} parent=15 // pred_region
        %p151 = scmp.lt.s32.totalorder %s16, 1
        %s152 = scalar_select %p151, %s16, 1
        %p153 = scmp.lt.s32.totalorder %s17, 0
        %s154 = scalar_select %p153, %s17, 0
        %s155 = smul.addr %s152, 4
        %s156 = sadd.s32 %s154, %s155
        %s157 = smul.addr %s156, 4
        %s158 = scalar_lea.vmem %s0, %s157
      $region20: #{_lambda_.37} parent=15 // pred_fallthru
        _
      // Predicated region
      $region21: #{_lambda_.37} parent=15 // pred_check
        %p159 = pneg %p69
      $region22: #{_lambda_.37} parent=15 // pred_check_branch
        %161 = sbr.rel (%p159) target = $region24
      $region23: #{_lambda_.37} parent=15 // pred_region
        %p162 = scmp.lt.s32.totalorder %s16, 1
        %s163 = scalar_select %p162, %s16, 1
        %s164 = smul.addr %s163, 4
        %s165 = smul.addr %s164, 4
        %s166 = scalar_lea.vmem %s1, %s165
      $region24: #{_lambda_.37} parent=15 // pred_fallthru
        _
      // Predicated region
      $region25: #{_lambda_.37} parent=15 // pred_check
        %p167 = pneg %p95
      $region26: #{_lambda_.37} parent=15 // pred_check_branch
        %169 = sbr.rel (%p167) target = $region28
      $region27: #{_lambda_.37} parent=15 // pred_region
        %p170 = scmp.lt.s32.totalorder %s16, 1
        %s171 = scalar_select %p170, %s16, 1
        %s172 = smul.addr %s171, 4
        %s173 = smul.addr %s172, 4
        %s174 = scalar_lea.vmem %s2, %s173
      $region28: #{_lambda_.37} parent=15 // pred_fallthru
        _
    $region16: #{_lambda_.37} parent=5 // pred_fallthru
      _
    %p175 = scmp.le.s32.totalorder 1, %s9
    %p176 = scmp.lt.s32.totalorder %s9, 3
    %p177 = pnand %p175, %p176
    %p178 = pneg %p177
    // Predicated region
    $region29: #{_lambda_.37} parent=5 // pred_check
      _
    $region30: #{_lambda_.37} parent=5 // pred_check_branch
      %180 = sbr.rel (%p177) target = $region32
    $region31: #{_lambda_.37} parent=5 // pred_region
      %s181 = ssub.s32 %s9, 1
      %p182 = scmp.lt.s32.totalorder %s18, 1
      %s183 = scalar_select %p182, %s18, 1
      %p184 = scmp.lt.s32.totalorder %s19, 0
      %s185 = scalar_select %p184, %s19, 0
      %s186 = smul.addr %s183, 4
      %s187 = sadd.s32 %s185, %s186
      %s188 = smul.addr %s187, 4
      %s189 = scalar_lea.vmem %s0, %s188
      %p190 = pneg %p49
      %p191 = pneg %p46
      %p192 = scmp.lt.s32.totalorder %s18, 1
      %s193 = scalar_select %p192, %s18, 1
      %s194 = smul.addr %s193, 4
      %s195 = smul.addr %s194, 4
      %s196 = scalar_lea.vmem %s1, %s195
      %p197 = pneg %p75
      %p198 = pneg %p72
      %p199 = scmp.lt.s32.totalorder %s18, 1
      %s200 = scalar_select %p199, %s18, 1
      %s201 = smul.addr %s200, 4
      %s202 = smul.addr %s201, 4
      %s203 = scalar_lea.vmem %s2, %s202
      %p204 = pneg %p101
      %p205 = pneg %p98
      %p206 = pneg %p129
      %p207 = pneg %p126
      %p208 = scmp.lt.s32.totalorder %s18, 1
      %s209 = scalar_select %p208, %s18, 1
      %p210 = scmp.lt.s32.totalorder %s19, 0
      %s211 = scalar_select %p210, %s19, 0
      %s212 = smul.addr %s209, 4
      %s213 = sadd.s32 %s211, %s212
      %s214 = smul.addr %s213, 4
      %s215 = scalar_lea.vmem %s3, %s214
      %p216 = scmp.lt.s32.totalorder %s18, 1
      %s217 = scalar_select %p216, %s18, 1
      %p218 = scmp.lt.s32.totalorder %s19, 0
      %s219 = scalar_select %p218, %s19, 0
      %s220 = smul.addr %s217, 4
      %s221 = sadd.s32 %s219, %s220
      %s222 = smul.addr %s221, 4
      %s223 = scalar_lea.vmem %s0, %s222
      %p224 = scmp.lt.s32.totalorder %s18, 1
      %s225 = scalar_select %p224, %s18, 1
      %s226 = smul.addr %s225, 4
      %s227 = smul.addr %s226, 4
      %s228 = scalar_lea.vmem %s1, %s227
      %p229 = scmp.lt.s32.totalorder %s18, 1
      %s230 = scalar_select %p229, %s18, 1
      %s231 = smul.addr %s230, 4
      %s232 = smul.addr %s231, 4
      %s233 = scalar_lea.vmem %s2, %s232
      %p234 = scmp.lt.s32.totalorder %s18, 1
      %s235 = scalar_select %p234, %s18, 1
      %p236 = scmp.lt.s32.totalorder %s19, 0
      %s237 = scalar_select %p236, %s19, 0
      %s238 = smul.addr %s235, 4
      %s239 = sadd.s32 %s237, %s238
      %s240 = smul.addr %s239, 4
      %s241 = scalar_lea.vmem %s3, %s240
      %v243 = vld [vmem:[%s223] sm:$0xf]
      %v244 = vld [vmem:[%s223 + $0x4] sm:$0xf]
      %v245 = vld [vmem:[%s223 + $0x8] sm:$0xf]
      %v246 = vld [vmem:[%s223 + $0xc] sm:$0xf]
      %v247 = vld [vmem:[%s228] sm:$0xf]
      %v248 = vld [vmem:[%s228 + $0x4] sm:$0xf]
      %v249 = vld [vmem:[%s228 + $0x8] sm:$0xf]
      %v250 = vld [vmem:[%s228 + $0xc] sm:$0xf]
      %v251 = vld [vmem:[%s233] sm:$0xf]
      %v252 = vld [vmem:[%s233 + $0x4] sm:$0xf]
      %v253 = vld [vmem:[%s233 + $0x8] sm:$0xf]
      %v254 = vld [vmem:[%s233 + $0xc] sm:$0xf]
      %vm255 = vcmask 64512
      %v257 = vsel %vm255, %v243, 0
      %v260 = vsel %vm255, %v247, 0
      %262 = vmatprep.subr.bf16.mxu0 0
      %263 = vmatpush1.bf16.xpose.msra.mxu0 %v260
      %264 = vmatprep.subr.bf16.mxu0 0
      %265 = vmatpush1.bf16.xpose.msra.mxu0 0
      %266 = vmatprep.subr.bf16.mxu0 0
      %267 = vmatpush1.bf16.xpose.msra.mxu0 0
      %268 = vmatprep.subr.bf16.mxu0 0
      %269 = vmatpush1.bf16.xpose.msra.mxu0 0
      %270 = vmatprep.subr.bf16.mxu0 0
      %271 = vmatpush1.bf16.xpose.msra.mxu0 0
      %272 = vmatprep.subr.bf16.mxu0 0
      %273 = vmatpush1.bf16.xpose.msra.mxu0 0
      %274 = vmatprep.subr.bf16.mxu0 0
      %275 = vmatpush1.bf16.xpose.msra.mxu0 0
      %276 = vmatprep.subr.bf16.mxu0 0
      %277 = vmatpush1.bf16.xpose.msra.mxu0 0
      %278 = vmatprep.subr.bf16.mxu0 0
      %279 = vmatpush1.bf16.xpose.msra.mxu0 0
      %280 = vmatprep.subr.bf16.mxu0 0
      %281 = vmatpush1.bf16.xpose.msra.mxu0 0
      %282 = vmatprep.subr.bf16.mxu0 0
      %283 = vmatpush1.bf16.xpose.msra.mxu0 0
      %284 = vmatprep.subr.bf16.mxu0 0
      %285 = vmatpush1.bf16.xpose.msra.mxu0 0
      %286 = vmatprep.subr.bf16.mxu0 0
      %287 = vmatpush1.bf16.xpose.msra.mxu0 0
      %288 = vmatprep.subr.bf16.mxu0 0
      %289 = vmatpush1.bf16.xpose.msra.mxu0 0
      %290 = vmatprep.subr.bf16.mxu0 0
      %291 = vmatpush1.bf16.xpose.msra.mxu0 0
      %292 = vmatprep.subr.bf16.mxu0 0
      %293 = vmatpush1.bf16.xpose.msra.mxu0 0
      %294 = vmatprep.mubr.bf16.mxu0 0
      %295 = vmatmul.mubr.bf16.gmra.mrb[0].mxu0 %v257
      %v296 = vpop.f32.mrb[0].mxu0
      %v297 = vadd.f32 0.0, %v296
      %v298 = vpop.f32.mrb[0].mxu0
      %v299 = vpop.f32.mrb[0].mxu0
      %v300 = vpop.f32.mrb[0].mxu0
      %301 = vdwg.mxu0
      %v303 = vsel %vm255, %v244, 0
      %v306 = vsel %vm255, %v248, 0
      %308 = vmatprep.subr.bf16.mxu0 0
      %309 = vmatpush1.bf16.xpose.msra.mxu0 %v306
      %310 = vmatprep.subr.bf16.mxu0 0
      %311 = vmatpush1.bf16.xpose.msra.mxu0 0
      %312 = vmatprep.subr.bf16.mxu0 0
      %313 = vmatpush1.bf16.xpose.msra.mxu0 0
      %314 = vmatprep.subr.bf16.mxu0 0
      %315 = vmatpush1.bf16.xpose.msra.mxu0 0
      %316 = vmatprep.subr.bf16.mxu0 0
      %317 = vmatpush1.bf16.xpose.msra.mxu0 0
      %318 = vmatprep.subr.bf16.mxu0 0
      %319 = vmatpush1.bf16.xpose.msra.mxu0 0
      %320 = vmatprep.subr.bf16.mxu0 0
      %321 = vmatpush1.bf16.xpose.msra.mxu0 0
      %322 = vmatprep.subr.bf16.mxu0 0
      %323 = vmatpush1.bf16.xpose.msra.mxu0 0
      %324 = vmatprep.subr.bf16.mxu0 0
      %325 = vmatpush1.bf16.xpose.msra.mxu0 0
      %326 = vmatprep.subr.bf16.mxu0 0
      %327 = vmatpush1.bf16.xpose.msra.mxu0 0
      %328 = vmatprep.subr.bf16.mxu0 0
      %329 = vmatpush1.bf16.xpose.msra.mxu0 0
      %330 = vmatprep.subr.bf16.mxu0 0
      %331 = vmatpush1.bf16.xpose.msra.mxu0 0
      %332 = vmatprep.subr.bf16.mxu0 0
      %333 = vmatpush1.bf16.xpose.msra.mxu0 0
      %334 = vmatprep.subr.bf16.mxu0 0
      %335 = vmatpush1.bf16.xpose.msra.mxu0 0
      %336 = vmatprep.subr.bf16.mxu0 0
      %337 = vmatpush1.bf16.xpose.msra.mxu0 0
      %338 = vmatprep.subr.bf16.mxu0 0
      %339 = vmatpush1.bf16.xpose.msra.mxu0 0
      %340 = vmatprep.mubr.bf16.mxu0 0
      %341 = vmatmul.mubr.bf16.gmra.mrb[0].mxu0 %v303
      %v342 = vpop.f32.mrb[0].mxu0
      %v343 = vadd.f32 0.0, %v342
      %v344 = vpop.f32.mrb[0].mxu0
      %v345 = vpop.f32.mrb[0].mxu0
      %v346 = vpop.f32.mrb[0].mxu0
      %347 = vdwg.mxu0
      %v349 = vsel %vm255, %v245, 0
      %v352 = vsel %vm255, %v249, 0
      %354 = vmatprep.subr.bf16.mxu0 0
      %355 = vmatpush1.bf16.xpose.msra.mxu0 %v352
      %356 = vmatprep.subr.bf16.mxu0 0
      %357 = vmatpush1.bf16.xpose.msra.mxu0 0
      %358 = vmatprep.subr.bf16.mxu0 0
      %359 = vmatpush1.bf16.xpose.msra.mxu0 0
      %360 = vmatprep.subr.bf16.mxu0 0
      %361 = vmatpush1.bf16.xpose.msra.mxu0 0
      %362 = vmatprep.subr.bf16.mxu0 0
      %363 = vmatpush1.bf16.xpose.msra.mxu0 0
      %364 = vmatprep.subr.bf16.mxu0 0
      %365 = vmatpush1.bf16.xpose.msra.mxu0 0
      %366 = vmatprep.subr.bf16.mxu0 0
      %367 = vmatpush1.bf16.xpose.msra.mxu0 0
      %368 = vmatprep.subr.bf16.mxu0 0
      %369 = vmatpush1.bf16.xpose.msra.mxu0 0
      %370 = vmatprep.subr.bf16.mxu0 0
      %371 = vmatpush1.bf16.xpose.msra.mxu0 0
      %372 = vmatprep.subr.bf16.mxu0 0
      %373 = vmatpush1.bf16.xpose.msra.mxu0 0
      %374 = vmatprep.subr.bf16.mxu0 0
      %375 = vmatpush1.bf16.xpose.msra.mxu0 0
      %376 = vmatprep.subr.bf16.mxu0 0
      %377 = vmatpush1.bf16.xpose.msra.mxu0 0
      %378 = vmatprep.subr.bf16.mxu0 0
      %379 = vmatpush1.bf16.xpose.msra.mxu0 0
      %380 = vmatprep.subr.bf16.mxu0 0
      %381 = vmatpush1.bf16.xpose.msra.mxu0 0
      %382 = vmatprep.subr.bf16.mxu0 0
      %383 = vmatpush1.bf16.xpose.msra.mxu0 0
      %384 = vmatprep.subr.bf16.mxu0 0
      %385 = vmatpush1.bf16.xpose.msra.mxu0 0
      %386 = vmatprep.mubr.bf16.mxu0 0
      %387 = vmatmul.mubr.bf16.gmra.mrb[0].mxu0 %v349
      %v388 = vpop.f32.mrb[0].mxu0
      %v389 = vadd.f32 0.0, %v388
      %v390 = vpop.f32.mrb[0].mxu0
      %v391 = vpop.f32.mrb[0].mxu0
      %v392 = vpop.f32.mrb[0].mxu0
      %393 = vdwg.mxu0
      %v395 = vsel %vm255, %v246, 0
      %v398 = vsel %vm255, %v250, 0
      %400 = vmatprep.subr.bf16.mxu0 0
      %401 = vmatpush1.bf16.xpose.msra.mxu0 %v398
      %402 = vmatprep.subr.bf16.mxu0 0
      %403 = vmatpush1.bf16.xpose.msra.mxu0 0
      %404 = vmatprep.subr.bf16.mxu0 0
      %405 = vmatpush1.bf16.xpose.msra.mxu0 0
      %406 = vmatprep.subr.bf16.mxu0 0
      %407 = vmatpush1.bf16.xpose.msra.mxu0 0
      %408 = vmatprep.subr.bf16.mxu0 0
      %409 = vmatpush1.bf16.xpose.msra.mxu0 0
      %410 = vmatprep.subr.bf16.mxu0 0
      %411 = vmatpush1.bf16.xpose.msra.mxu0 0
      %412 = vmatprep.subr.bf16.mxu0 0
      %413 = vmatpush1.bf16.xpose.msra.mxu0 0
      %414 = vmatprep.subr.bf16.mxu0 0
      %415 = vmatpush1.bf16.xpose.msra.mxu0 0
      %416 = vmatprep.subr.bf16.mxu0 0
      %417 = vmatpush1.bf16.xpose.msra.mxu0 0
      %418 = vmatprep.subr.bf16.mxu0 0
      %419 = vmatpush1.bf16.xpose.msra.mxu0 0
      %420 = vmatprep.subr.bf16.mxu0 0
      %421 = vmatpush1.bf16.xpose.msra.mxu0 0
      %422 = vmatprep.subr.bf16.mxu0 0
      %423 = vmatpush1.bf16.xpose.msra.mxu0 0
      %424 = vmatprep.subr.bf16.mxu0 0
      %425 = vmatpush1.bf16.xpose.msra.mxu0 0
      %426 = vmatprep.subr.bf16.mxu0 0
      %427 = vmatpush1.bf16.xpose.msra.mxu0 0
      %428 = vmatprep.subr.bf16.mxu0 0
      %429 = vmatpush1.bf16.xpose.msra.mxu0 0
      %430 = vmatprep.subr.bf16.mxu0 0
      %431 = vmatpush1.bf16.xpose.msra.mxu0 0
      %432 = vmatprep.mubr.bf16.mxu0 0
      %433 = vmatmul.mubr.bf16.gmra.mrb[0].mxu0 %v395
      %v434 = vpop.f32.mrb[0].mxu0
      %v435 = vadd.f32 0.0, %v434
      %v436 = vpop.f32.mrb[0].mxu0
      %v437 = vpop.f32.mrb[0].mxu0
      %v438 = vpop.f32.mrb[0].mxu0
      %439 = vdwg.mxu0
      %v440 = vmul.f32 %v297, 0.35355338
      %v441 = vmul.f32 %v343, 0.35355338
      %v442 = vmul.f32 %v389, 0.35355338
      %v443 = vmul.f32 %v435, 0.35355338
      %v444 = vsel %vm255, %v440, -inf
      %445 = vmax.xlane.f32.xlu0 %v444
      %v446 = vpop.xlane.xlu0 %445
      %v447 = vsel %vm255, %v441, -inf
      %448 = vmax.xlane.f32.xlu0 %v447
      %v449 = vpop.xlane.xlu0 %448
      %v450 = vsel %vm255, %v442, -inf
      %451 = vmax.xlane.f32.xlu0 %v450
      %v452 = vpop.xlane.xlu0 %451
      %v453 = vsel %vm255, %v443, -inf
      %454 = vmax.xlane.f32.xlu0 %v453
      %v455 = vpop.xlane.xlu0 %454
      %v456 = vsub.f32 %v440, %v446
      %v457 = vsub.f32 %v441, %v449
      %v458 = vsub.f32 %v442, %v452
      %v459 = vsub.f32 %v443, %v455
      %v460 = vmul.f32 %v456, 1.442695
      %v461 = vpow.pop %v460
      %v462 = vmul.f32 %v457, 1.442695
      %v463 = vpow.pop %v462
      %v464 = vmul.f32 %v458, 1.442695
      %v465 = vpow.pop %v464
      %v466 = vmul.f32 %v459, 1.442695
      %v467 = vpow.pop %v466
      %v468 = vsel %vm255, %v461, 0.0
      %469 = vadd.xlane.f32.xlu0 %v468
      %v470 = vpop.xlane.xlu0 %469
      %v471 = vsel %vm255, %v463, 0.0
      %472 = vadd.xlane.f32.xlu0 %v471
      %v473 = vpop.xlane.xlu0 %472
      %v474 = vsel %vm255, %v465, 0.0
      %475 = vadd.xlane.f32.xlu0 %v474
      %v476 = vpop.xlane.xlu0 %475
      %v477 = vsel %vm255, %v467, 0.0
      %478 = vadd.xlane.f32.xlu0 %v477
      %v479 = vpop.xlane.xlu0 %478
      %v480 = vrcp.pop %v470
      %v481 = vrcp.pop %v473
      %v482 = vrcp.pop %v476
      %v483 = vrcp.pop %v479
      %v484 = vmul.f32 %v461, %v480
      %v485 = vmul.f32 %v463, %v481
      %v486 = vmul.f32 %v465, %v482
      %v487 = vmul.f32 %v467, %v483
      %v488 = vpack.c.bf16 %v484, %v484
      %v489 = vpack.c.bf16 %v485, %v485
      %v490 = vpack.c.bf16 %v486, %v486
      %v491 = vpack.c.bf16 %v487, %v487
      %v493 = vsel %vm255, %v488, 0
      %vm495 = vcmask 1043456
      %v497 = vsel %vm495, %v251, 0
      %499 = vmatprep.subr.bf16.mxu0 0
      %500 = vmatpush1.bf16.msra.mxu0 %v497
      %501 = vmatprep.subr.bf16.mxu0 0
      %502 = vmatpush1.bf16.msra.mxu0 0
      %503 = vmatprep.subr.bf16.mxu0 0
      %504 = vmatpush1.bf16.msra.mxu0 0
      %505 = vmatprep.subr.bf16.mxu0 0
      %506 = vmatpush1.bf16.msra.mxu0 0
      %507 = vmatprep.subr.bf16.mxu0 0
      %508 = vmatpush1.bf16.msra.mxu0 0
      %509 = vmatprep.subr.bf16.mxu0 0
      %510 = vmatpush1.bf16.msra.mxu0 0
      %511 = vmatprep.subr.bf16.mxu0 0
      %512 = vmatpush1.bf16.msra.mxu0 0
      %513 = vmatprep.subr.bf16.mxu0 0
      %514 = vmatpush1.bf16.msra.mxu0 0
      %515 = vmatprep.subr.bf16.mxu0 0
      %516 = vmatpush1.bf16.msra.mxu0 0
      %517 = vmatprep.subr.bf16.mxu0 0
      %518 = vmatpush1.bf16.msra.mxu0 0
      %519 = vmatprep.subr.bf16.mxu0 0
      %520 = vmatpush1.bf16.msra.mxu0 0
      %521 = vmatprep.subr.bf16.mxu0 0
      %522 = vmatpush1.bf16.msra.mxu0 0
      %523 = vmatprep.subr.bf16.mxu0 0
      %524 = vmatpush1.bf16.msra.mxu0 0
      %525 = vmatprep.subr.bf16.mxu0 0
      %526 = vmatpush1.bf16.msra.mxu0 0
      %527 = vmatprep.subr.bf16.mxu0 0
      %528 = vmatpush1.bf16.msra.mxu0 0
      %529 = vmatprep.subr.bf16.mxu0 0
      %530 = vmatpush1.bf16.msra.mxu0 0
      %531 = vmatprep.mubr.bf16.mxu0 0
      %532 = vmatmul.mubr.bf16.gmra.mrb[0].mxu0 %v493
      %v533 = vpop.f32.mrb[0].mxu0
      %v534 = vadd.f32 0.0, %v533
      %v535 = vpop.f32.mrb[0].mxu0
      %v536 = vpop.f32.mrb[0].mxu0
      %v537 = vpop.f32.mrb[0].mxu0
      %538 = vdwg.mxu0
      %v540 = vsel %vm255, %v489, 0
      %v543 = vsel %vm495, %v252, 0
      %545 = vmatprep.subr.bf16.mxu0 0
      %546 = vmatpush1.bf16.msra.mxu0 %v543
      %547 = vmatprep.subr.bf16.mxu0 0
      %548 = vmatpush1.bf16.msra.mxu0 0
      %549 = vmatprep.subr.bf16.mxu0 0
      %550 = vmatpush1.bf16.msra.mxu0 0
      %551 = vmatprep.subr.bf16.mxu0 0
      %552 = vmatpush1.bf16.msra.mxu0 0
      %553 = vmatprep.subr.bf16.mxu0 0
      %554 = vmatpush1.bf16.msra.mxu0 0
      %555 = vmatprep.subr.bf16.mxu0 0
      %556 = vmatpush1.bf16.msra.mxu0 0
      %557 = vmatprep.subr.bf16.mxu0 0
      %558 = vmatpush1.bf16.msra.mxu0 0
      %559 = vmatprep.subr.bf16.mxu0 0
      %560 = vmatpush1.bf16.msra.mxu0 0
      %561 = vmatprep.subr.bf16.mxu0 0
      %562 = vmatpush1.bf16.msra.mxu0 0
      %563 = vmatprep.subr.bf16.mxu0 0
      %564 = vmatpush1.bf16.msra.mxu0 0
      %565 = vmatprep.subr.bf16.mxu0 0
      %566 = vmatpush1.bf16.msra.mxu0 0
      %567 = vmatprep.subr.bf16.mxu0 0
      %568 = vmatpush1.bf16.msra.mxu0 0
      %569 = vmatprep.subr.bf16.mxu0 0
      %570 = vmatpush1.bf16.msra.mxu0 0
      %571 = vmatprep.subr.bf16.mxu0 0
      %572 = vmatpush1.bf16.msra.mxu0 0
      %573 = vmatprep.subr.bf16.mxu0 0
      %574 = vmatpush1.bf16.msra.mxu0 0
      %575 = vmatprep.subr.bf16.mxu0 0
      %576 = vmatpush1.bf16.msra.mxu0 0
      %577 = vmatprep.mubr.bf16.mxu0 0
      %578 = vmatmul.mubr.bf16.gmra.mrb[0].mxu0 %v540
      %v579 = vpop.f32.mrb[0].mxu0
      %v580 = vadd.f32 0.0, %v579
      %v581 = vpop.f32.mrb[0].mxu0
      %v582 = vpop.f32.mrb[0].mxu0
      %v583 = vpop.f32.mrb[0].mxu0
      %584 = vdwg.mxu0
      %v586 = vsel %vm255, %v490, 0
      %v589 = vsel %vm495, %v253, 0
      %591 = vmatprep.subr.bf16.mxu0 0
      %592 = vmatpush1.bf16.msra.mxu0 %v589
      %593 = vmatprep.subr.bf16.mxu0 0
      %594 = vmatpush1.bf16.msra.mxu0 0
      %595 = vmatprep.subr.bf16.mxu0 0
      %596 = vmatpush1.bf16.msra.mxu0 0
      %597 = vmatprep.subr.bf16.mxu0 0
      %598 = vmatpush1.bf16.msra.mxu0 0
      %599 = vmatprep.subr.bf16.mxu0 0
      %600 = vmatpush1.bf16.msra.mxu0 0
      %601 = vmatprep.subr.bf16.mxu0 0
      %602 = vmatpush1.bf16.msra.mxu0 0
      %603 = vmatprep.subr.bf16.mxu0 0
      %604 = vmatpush1.bf16.msra.mxu0 0
      %605 = vmatprep.subr.bf16.mxu0 0
      %606 = vmatpush1.bf16.msra.mxu0 0
      %607 = vmatprep.subr.bf16.mxu0 0
      %608 = vmatpush1.bf16.msra.mxu0 0
      %609 = vmatprep.subr.bf16.mxu0 0
      %610 = vmatpush1.bf16.msra.mxu0 0
      %611 = vmatprep.subr.bf16.mxu0 0
      %612 = vmatpush1.bf16.msra.mxu0 0
      %613 = vmatprep.subr.bf16.mxu0 0
      %614 = vmatpush1.bf16.msra.mxu0 0
      %615 = vmatprep.subr.bf16.mxu0 0
      %616 = vmatpush1.bf16.msra.mxu0 0
      %617 = vmatprep.subr.bf16.mxu0 0
      %618 = vmatpush1.bf16.msra.mxu0 0
      %619 = vmatprep.subr.bf16.mxu0 0
      %620 = vmatpush1.bf16.msra.mxu0 0
      %621 = vmatprep.subr.bf16.mxu0 0
      %622 = vmatpush1.bf16.msra.mxu0 0
      %623 = vmatprep.mubr.bf16.mxu0 0
      %624 = vmatmul.mubr.bf16.gmra.mrb[0].mxu0 %v586
      %v625 = vpop.f32.mrb[0].mxu0
      %v626 = vadd.f32 0.0, %v625
      %v627 = vpop.f32.mrb[0].mxu0
      %v628 = vpop.f32.mrb[0].mxu0
      %v629 = vpop.f32.mrb[0].mxu0
      %630 = vdwg.mxu0
      %v632 = vsel %vm255, %v491, 0
      %v635 = vsel %vm495, %v254, 0
      %637 = vmatprep.subr.bf16.mxu0 0
      %638 = vmatpush1.bf16.msra.mxu0 %v635
      %639 = vmatprep.subr.bf16.mxu0 0
      %640 = vmatpush1.bf16.msra.mxu0 0
      %641 = vmatprep.subr.bf16.mxu0 0
      %642 = vmatpush1.bf16.msra.mxu0 0
      %643 = vmatprep.subr.bf16.mxu0 0
      %644 = vmatpush1.bf16.msra.mxu0 0
      %645 = vmatprep.subr.bf16.mxu0 0
      %646 = vmatpush1.bf16.msra.mxu0 0
      %647 = vmatprep.subr.bf16.mxu0 0
      %648 = vmatpush1.bf16.msra.mxu0 0
      %649 = vmatprep.subr.bf16.mxu0 0
      %650 = vmatpush1.bf16.msra.mxu0 0
      %651 = vmatprep.subr.bf16.mxu0 0
      %652 = vmatpush1.bf16.msra.mxu0 0
      %653 = vmatprep.subr.bf16.mxu0 0
      %654 = vmatpush1.bf16.msra.mxu0 0
      %655 = vmatprep.subr.bf16.mxu0 0
      %656 = vmatpush1.bf16.msra.mxu0 0
      %657 = vmatprep.subr.bf16.mxu0 0
      %658 = vmatpush1.bf16.msra.mxu0 0
      %659 = vmatprep.subr.bf16.mxu0 0
      %660 = vmatpush1.bf16.msra.mxu0 0
      %661 = vmatprep.subr.bf16.mxu0 0
      %662 = vmatpush1.bf16.msra.mxu0 0
      %663 = vmatprep.subr.bf16.mxu0 0
      %664 = vmatpush1.bf16.msra.mxu0 0
      %665 = vmatprep.subr.bf16.mxu0 0
      %666 = vmatpush1.bf16.msra.mxu0 0
      %667 = vmatprep.subr.bf16.mxu0 0
      %668 = vmatpush1.bf16.msra.mxu0 0
      %669 = vmatprep.mubr.bf16.mxu0 0
      %670 = vmatmul.mubr.bf16.gmra.mrb[0].mxu0 %v632
      %v671 = vpop.f32.mrb[0].mxu0
      %v672 = vadd.f32 0.0, %v671
      %v673 = vpop.f32.mrb[0].mxu0
      %v674 = vpop.f32.mrb[0].mxu0
      %v675 = vpop.f32.mrb[0].mxu0
      %676 = vdwg.mxu0
      %v677 = vpack.c.bf16 %v534, %v534
      %v678 = vpack.c.bf16 %v580, %v580
      %v679 = vpack.c.bf16 %v626, %v626
      %v680 = vpack.c.bf16 %v672, %v672
      %vm681 = vcmask 60416
      %682 = vst.msk [vmem:[%s241] sm:$0xf] %vm681, %v677
      %683 = vst.msk [vmem:[%s241 + $0x4] sm:$0xf] %vm681, %v678
      %684 = vst.msk [vmem:[%s241 + $0x8] sm:$0xf] %vm681, %v679
      %685 = vst.msk [vmem:[%s241 + $0xc] sm:$0xf] %vm681, %v680
      %p686 = scmp.lt.s32.totalorder %s18, 1
      %s687 = scalar_select %p686, %s18, 1
      %p688 = scmp.lt.s32.totalorder %s19, 0
      %s689 = scalar_select %p688, %s19, 0
      %s690 = smul.addr %s687, 4
      %s691 = sadd.s32 %s689, %s690
      %s692 = smul.addr %s691, 4
      %s693 = scalar_lea.vmem %s3, %s692
      // Predicated region
      $region33: #{_lambda_.37} parent=31 // pred_check
        %p694 = pneg %p126
      $region34: #{_lambda_.37} parent=31 // pred_check_branch
        %696 = sbr.rel (%p694) target = $region36
      $region35: #{_lambda_.37} parent=31 // pred_region
        _
      $region36: #{_lambda_.37} parent=31 // pred_fallthru
        _
    $region32: #{_lambda_.37} parent=5 // pred_fallthru
      _
    %p697 = scmp.le.s32.totalorder 2, %s9
    // Predicated region
    $region37: #{_lambda_.37} parent=5 // pred_check
      %p698 = pneg %p697
    $region38: #{_lambda_.37} parent=5 // pred_check_branch
      %700 = sbr.rel (%p698) target = $region40
    $region39: #{_lambda_.37} parent=5 // pred_region
      %s701 = ssub.s32 %s9, 2
      // Predicated region
      $region41: #{_lambda_.37} parent=39 // pred_check
        %p702 = pneg %p132
      $region42: #{_lambda_.37} parent=39 // pred_check_branch
        %704 = sbr.rel (%p702) target = $region44
      $region43: #{_lambda_.37} parent=39 // pred_region
        %p705 = scmp.lt.s32.totalorder %s20, 1
        %s706 = scalar_select %p705, %s20, 1
        %p707 = scmp.lt.s32.totalorder %s21, 0
        %s708 = scalar_select %p707, %s21, 0
        %s709 = smul.addr %s706, 4
        %s710 = sadd.s32 %s708, %s709
        %s711 = smul.addr %s710, 4
        %s712 = scalar_lea.vmem %s3, %s711
      $region44: #{_lambda_.37} parent=39 // pred_fallthru
        _
    $region40: #{_lambda_.37} parent=5 // pred_fallthru
      _
  $region6: #{_lambda_.37} parent=0 // loop_footer
    %s13 = sadd.s32 1, %s9
  $region7: #{_lambda_.37} parent=0 // loop_footer_branch
    %8 = sbr.rel target = $region3
  $region8: #{_lambda_.37} parent=0 // loop_exit
    _

// kernel: _lambda_.30
$region0: #{_lambda_.30}
  #allocation0 [shape = 'u32[]', space=smem, size = 0x4, offset = 0x4, fixed_abs, tag = 'smem constant byte address 0x4 - core index']
  #allocation1 [shape = 'u32[144,128]{1,0:T(1,128)}', space=vmem, size = 0x12000, scoped, tag = 'internal scratch']
  %s0 = inlined_call_operand.vmem [shape: f32[16,32], index: 0, kind: input, shape index: {}]
  %s1 = inlined_call_operand.vmem [shape: bf16[32,64], index: 1, kind: input, shape index: {}]
  %s2 = inlined_call_operand.vmem [shape: f32[1,64], index: 2, kind: input, shape index: {}]
  %s3 = inlined_call_operand.vmem [shape: bf16[64,32], index: 3, kind: input, shape index: {}]
  %s4 = inlined_call_operand.vmem [shape: f32[1,32], index: 4, kind: input, shape index: {}, may-alias: {4,6}]
  %s5 = inlined_call_operand.vmem [shape: f32[1,32], index: 5, kind: input, shape index: {}]
  %s6 = inlined_call_operand.vmem [shape: f32[1,32], index: 6, kind: input, shape index: {}, may-alias: {4,6}]
  %s7 = inlined_call_operand.vmem [shape: f32[16,32], index: 7, kind: output, shape index: {}]
  %s8 = sld [smem:[#allocation0]]
  $region38: #{_lambda_.30} parent=0
    _
  %s10 = ssub.s32 1, %s8
  %s11 = scalar_select 0, %s10, %s8
  // Predicated region
  $region2: #{_lambda_.30} parent=0 // pred_check
    _
  $region3: #{_lambda_.30} parent=0 // pred_check_branch
    %13 = sbr.rel (0) target = $region5
  $region4: #{_lambda_.30} parent=0 // pred_region
    _
  $region5: #{_lambda_.30} parent=0 // pred_fallthru
    _
  // Predicated region
  $region6: #{_lambda_.30} parent=0 // pred_check
    _
  $region7: #{_lambda_.30} parent=0 // pred_check_branch
    %15 = sbr.rel (0) target = $region9
  $region8: #{_lambda_.30} parent=0 // pred_region
    _
  $region9: #{_lambda_.30} parent=0 // pred_fallthru
    _
  // Predicated region
  $region10: #{_lambda_.30} parent=0 // pred_check
    _
  $region11: #{_lambda_.30} parent=0 // pred_check_branch
    %17 = sbr.rel (0) target = $region13
  $region12: #{_lambda_.30} parent=0 // pred_region
    _
  $region13: #{_lambda_.30} parent=0 // pred_fallthru
    _
  // Predicated region
  $region14: #{_lambda_.30} parent=0 // pred_check
    _
  $region15: #{_lambda_.30} parent=0 // pred_check_branch
    %19 = sbr.rel (0) target = $region17
  $region16: #{_lambda_.30} parent=0 // pred_region
    _
  $region17: #{_lambda_.30} parent=0 // pred_fallthru
    _
  // Predicated region
  $region18: #{_lambda_.30} parent=0 // pred_check
    _
  $region19: #{_lambda_.30} parent=0 // pred_check_branch
    %21 = sbr.rel (0) target = $region21
  $region20: #{_lambda_.30} parent=0 // pred_region
    _
  $region21: #{_lambda_.30} parent=0 // pred_fallthru
    _
  // Predicated region
  $region22: #{_lambda_.30} parent=0 // pred_check
    _
  $region23: #{_lambda_.30} parent=0 // pred_check_branch
    %23 = sbr.rel (0) target = $region25
  $region24: #{_lambda_.30} parent=0 // pred_region
    _
  $region25: #{_lambda_.30} parent=0 // pred_fallthru
    _
  // Predicated region
  $region26: #{_lambda_.30} parent=0 // pred_check
    _
  $region27: #{_lambda_.30} parent=0 // pred_check_branch
    %25 = sbr.rel (0) target = $region29
  $region28: #{_lambda_.30} parent=0 // pred_region
    _
  $region29: #{_lambda_.30} parent=0 // pred_fallthru
    _
  %v27 = vld [vmem:[%s0] sm:$0xff]
  %v28 = vld [vmem:[%s0 + $0x8] sm:$0xff]
  %v29 = vpack.c.bf16 %v28, %v27
  %v30 = vld [vmem:[%s1] sm:$0xf]
  %v31 = vld [vmem:[%s1 + $0x4] sm:$0xf]
  %v32 = vld [vmem:[%s1 + $0x8] sm:$0xf]
  %v33 = vld [vmem:[%s1 + $0xc] sm:$0xf]
  %v34 = vld [vmem:[%s2] sm:$0x1]
  %v36 = vlaneseq
  %v37 = vshrl.u32 %v36, 7
  %v38 = vsub.s32 0, %v37
  %v39 = vrot.slane %v34, %v38
  %v45 = vunpack.c.l.b16 %v30
  %v46 = vunpack.c.l.b16 %v31
  %v47 = vunpack.c.l.b16 %v32
  %v48 = vunpack.c.l.b16 %v33
  %v49 = vpack.c.b16 %v46, %v45
  %v50 = vpack.c.b16 %v48, %v47
  %vm53 = vcmask 261120
  %v55 = vsel %vm53, %v29, 0
  %57 = vmatprep.subr.bf16.mxu0 0
  %58 = vmatpush1.bf16.msra.mxu0 %v49
  %59 = vmatprep.subr.bf16.mxu0 0
  %60 = vmatpush1.bf16.msra.mxu0 %v50
  %61 = vmatprep.subr.bf16.mxu0 0
  %62 = vmatpush1.bf16.msra.mxu0 0
  %63 = vmatprep.subr.bf16.mxu0 0
  %64 = vmatpush1.bf16.msra.mxu0 0
  %65 = vmatprep.subr.bf16.mxu0 0
  %66 = vmatpush1.bf16.msra.mxu0 0
  %67 = vmatprep.subr.bf16.mxu0 0
  %68 = vmatpush1.bf16.msra.mxu0 0
  %69 = vmatprep.subr.bf16.mxu0 0
  %70 = vmatpush1.bf16.msra.mxu0 0
  %71 = vmatprep.subr.bf16.mxu0 0
  %72 = vmatpush1.bf16.msra.mxu0 0
  %73 = vmatprep.subr.bf16.mxu0 0
  %74 = vmatpush1.bf16.msra.mxu0 0
  %75 = vmatprep.subr.bf16.mxu0 0
  %76 = vmatpush1.bf16.msra.mxu0 0
  %77 = vmatprep.subr.bf16.mxu0 0
  %78 = vmatpush1.bf16.msra.mxu0 0
  %79 = vmatprep.subr.bf16.mxu0 0
  %80 = vmatpush1.bf16.msra.mxu0 0
  %81 = vmatprep.subr.bf16.mxu0 0
  %82 = vmatpush1.bf16.msra.mxu0 0
  %83 = vmatprep.subr.bf16.mxu0 0
  %84 = vmatpush1.bf16.msra.mxu0 0
  %85 = vmatprep.subr.bf16.mxu0 0
  %86 = vmatpush1.bf16.msra.mxu0 0
  %87 = vmatprep.subr.bf16.mxu0 0
  %88 = vmatpush1.bf16.msra.mxu0 0
  %89 = vmatprep.mubr.bf16.mxu0 0
  %90 = vmatmul.mubr.bf16.gmra.mrb[0].mxu0 %v55
  %v91 = vpop.f32.mrb[0].mxu0
  %v92 = vadd.f32 %v39, %v91
  %v93 = vpop.f32.mrb[0].mxu0
  %v94 = vpop.f32.mrb[0].mxu0
  %v95 = vadd.f32 %v39, %v94
  %v96 = vpop.f32.mrb[0].mxu0
  %97 = vdwg.mxu0
  %v98 = vmax.f32 %v92, 0.0
  %v99 = vmax.f32 %v95, 0.0
  %v100 = vpack.c.bf16 %v99, %v98
  %v101 = vld [vmem:[%s3] sm:$0xf]
  %v102 = vld [vmem:[%s3 + $0x4] sm:$0xf]
  %v103 = vld [vmem:[%s3 + $0x8] sm:$0xf]
  %v104 = vld [vmem:[%s3 + $0xc] sm:$0xf]
  %v105 = vld [vmem:[%s3 + $0x10] sm:$0xf]
  %v106 = vld [vmem:[%s3 + $0x14] sm:$0xf]
  %v107 = vld [vmem:[%s3 + $0x18] sm:$0xf]
  %v108 = vld [vmem:[%s3 + $0x1c] sm:$0xf]
  %v109 = vld [vmem:[%s4] sm:$0x1]
  %v111 = vlaneseq
  %v112 = vshrl.u32 %v111, 7
  %v113 = vsub.s32 0, %v112
  %v114 = vrot.slane %v109, %v113
  %v124 = vunpack.c.l.b16 %v101
  %v125 = vunpack.c.l.b16 %v102
  %v126 = vunpack.c.l.b16 %v103
  %v127 = vunpack.c.l.b16 %v104
  %v128 = vunpack.c.l.b16 %v105
  %v129 = vunpack.c.l.b16 %v106
  %v130 = vunpack.c.l.b16 %v107
  %v131 = vunpack.c.l.b16 %v108
  %v132 = vpack.c.b16 %v125, %v124
  %v133 = vpack.c.b16 %v127, %v126
  %v134 = vpack.c.b16 %v129, %v128
  %v135 = vpack.c.b16 %v131, %v130
  %vm140 = vcmask 523264
  %v142 = vsel %vm140, %v100, 0
  %144 = vmatprep.subr.bf16.mxu0 0
  %145 = vmatpush1.bf16.msra.mxu0 %v132
  %146 = vmatprep.subr.bf16.mxu0 0
  %147 = vmatpush1.bf16.msra.mxu0 %v133
  %148 = vmatprep.subr.bf16.mxu0 0
  %149 = vmatpush1.bf16.msra.mxu0 %v134
  %150 = vmatprep.subr.bf16.mxu0 0
  %151 = vmatpush1.bf16.msra.mxu0 %v135
  %152 = vmatprep.subr.bf16.mxu0 0
  %153 = vmatpush1.bf16.msra.mxu0 0
  %154 = vmatprep.subr.bf16.mxu0 0
  %155 = vmatpush1.bf16.msra.mxu0 0
  %156 = vmatprep.subr.bf16.mxu0 0
  %157 = vmatpush1.bf16.msra.mxu0 0
  %158 = vmatprep.subr.bf16.mxu0 0
  %159 = vmatpush1.bf16.msra.mxu0 0
  %160 = vmatprep.subr.bf16.mxu0 0
  %161 = vmatpush1.bf16.msra.mxu0 0
  %162 = vmatprep.subr.bf16.mxu0 0
  %163 = vmatpush1.bf16.msra.mxu0 0
  %164 = vmatprep.subr.bf16.mxu0 0
  %165 = vmatpush1.bf16.msra.mxu0 0
  %166 = vmatprep.subr.bf16.mxu0 0
  %167 = vmatpush1.bf16.msra.mxu0 0
  %168 = vmatprep.subr.bf16.mxu0 0
  %169 = vmatpush1.bf16.msra.mxu0 0
  %170 = vmatprep.subr.bf16.mxu0 0
  %171 = vmatpush1.bf16.msra.mxu0 0
  %172 = vmatprep.subr.bf16.mxu0 0
  %173 = vmatpush1.bf16.msra.mxu0 0
  %174 = vmatprep.subr.bf16.mxu0 0
  %175 = vmatpush1.bf16.msra.mxu0 0
  %176 = vmatprep.mubr.bf16.mxu0 0
  %177 = vmatmul.mubr.bf16.gmra.mrb[0].mxu0 %v142
  %v178 = vpop.f32.mrb[0].mxu0
  %v179 = vadd.f32 %v114, %v178
  %v180 = vpop.f32.mrb[0].mxu0
  %v181 = vpop.f32.mrb[0].mxu0
  %v182 = vadd.f32 %v114, %v181
  %v183 = vpop.f32.mrb[0].mxu0
  %184 = vdwg.mxu0
  %v185 = vadd.f32 %v179, %v27
  %v186 = vadd.f32 %v182, %v28
  %v187 = vld [vmem:[%s5] sm:$0x1]
  %v188 = vld [vmem:[%s6] sm:$0x1]
  %v189 = vsel %vm53, %v185, 0.0
  %190 = vadd.xlane.f32.xlu0 %v189
  %v191 = vpop.xlane.xlu0 %190
  %v192 = vsel %vm53, %v186, 0.0
  %193 = vadd.xlane.f32.xlu0 %v192
  %v194 = vpop.xlane.xlu0 %193
  %v195 = vrcp.pop 32.0
  %v196 = vmul.f32 %v191, %v195
  %v197 = vmul.f32 %v194, %v195
  %v198 = vsub.f32 %v185, %v196
  %v199 = vsub.f32 %v186, %v197
  %v200 = vmul.f32 %v198, %v198
  %v201 = vmul.f32 %v199, %v199
  %v202 = vsel %vm53, %v200, 0.0
  %203 = vadd.xlane.f32.xlu0 %v202
  %v204 = vpop.xlane.xlu0 %203
  %v205 = vsel %vm53, %v201, 0.0
  %206 = vadd.xlane.f32.xlu0 %v205
  %v207 = vpop.xlane.xlu0 %206
  %v208 = vmul.f32 %v204, %v195
  %v209 = vmul.f32 %v207, %v195
  %v210 = vadd.f32 %v208, 1e-05
  %v211 = vadd.f32 %v209, 1e-05
  %v212 = vrsqrt.pop %v210
  %v213 = vrsqrt.pop %v211
  %v214 = vmul.f32 %v198, %v212
  %v215 = vmul.f32 %v199, %v213
  %v217 = vlaneseq
  %v218 = vshrl.u32 %v217, 7
  %v219 = vsub.s32 0, %v218
  %v220 = vrot.slane %v187, %v219
  %v222 = vmul.f32 %v214, %v220
  %v223 = vmul.f32 %v215, %v220
  %v225 = vlaneseq
  %v226 = vshrl.u32 %v225, 7
  %v227 = vsub.s32 0, %v226
  %v228 = vrot.slane %v188, %v227
  %v230 = vadd.f32 %v222, %v228
  %v231 = vadd.f32 %v223, %v228
  %232 = vst.msk [vmem:[%s7] sm:$0xff] %vm53, %v230
  %233 = vst.msk [vmem:[%s7 + $0x8] sm:$0xff] %vm53, %v231
  // Predicated region
  $region30: #{_lambda_.30} parent=0 // pred_check
    _
  $region31: #{_lambda_.30} parent=0 // pred_check_branch
    %235 = sbr.rel (0) target = $region33
  $region32: #{_lambda_.30} parent=0 // pred_region
    _
  $region33: #{_lambda_.30} parent=0 // pred_fallthru
    _
  // Predicated region
  $region34: #{_lambda_.30} parent=0 // pred_check
    _
  $region35: #{_lambda_.30} parent=0 // pred_check_branch
    %237 = sbr.rel (0) target = $region37
  $region36: #{_lambda_.30} parent=0 // pred_region
    _
  $region37: #{_lambda_.30} parent=0 // pred_fallthru
    _

// kernel: _lambda_.53
$region0: #{_lambda_.53}
  #allocation0 [shape = 'u32[]', space=smem, size = 0x4, offset = 0x4, fixed_abs, tag = 'smem constant byte address 0x4 - core index']
  #allocation1 [shape = 'u32[144,128]{1,0:T(1,128)}', space=vmem, size = 0x12000, scoped, tag = 'internal scratch']
  %s0 = inlined_call_operand.vmem [shape: f32[16,32], index: 0, kind: input, shape index: {}]
  %s1 = inlined_call_operand.vmem [shape: bf16[32,128], index: 1, kind: input, shape index: {}]
  %s2 = inlined_call_operand.vmem [shape: f32[1,128], index: 2, kind: input, shape index: {}]
  %s3 = inlined_call_operand.vmem [shape: f32[16,128], index: 3, kind: output, shape index: {}]
  %s4 = sld [smem:[#allocation0]]
  $region22: #{_lambda_.53} parent=0
    _
  %s6 = ssub.s32 1, %s4
  %s7 = scalar_select 0, %s6, %s4
  // Predicated region
  $region2: #{_lambda_.53} parent=0 // pred_check
    _
  $region3: #{_lambda_.53} parent=0 // pred_check_branch
    %9 = sbr.rel (0) target = $region5
  $region4: #{_lambda_.53} parent=0 // pred_region
    _
  $region5: #{_lambda_.53} parent=0 // pred_fallthru
    _
  // Predicated region
  $region6: #{_lambda_.53} parent=0 // pred_check
    _
  $region7: #{_lambda_.53} parent=0 // pred_check_branch
    %11 = sbr.rel (0) target = $region9
  $region8: #{_lambda_.53} parent=0 // pred_region
    _
  $region9: #{_lambda_.53} parent=0 // pred_fallthru
    _
  // Predicated region
  $region10: #{_lambda_.53} parent=0 // pred_check
    _
  $region11: #{_lambda_.53} parent=0 // pred_check_branch
    %13 = sbr.rel (0) target = $region13
  $region12: #{_lambda_.53} parent=0 // pred_region
    _
  $region13: #{_lambda_.53} parent=0 // pred_fallthru
    _
  %v15 = vld [vmem:[%s0] sm:$0xff]
  %v16 = vld [vmem:[%s0 + $0x8] sm:$0xff]
  %v17 = vpack.c.bf16 %v16, %v15
  %v18 = vld [vmem:[%s1] sm:$0xf]
  %v19 = vld [vmem:[%s1 + $0x4] sm:$0xf]
  %v20 = vld [vmem:[%s1 + $0x8] sm:$0xf]
  %v21 = vld [vmem:[%s1 + $0xc] sm:$0xf]
  %v22 = vld [vmem:[%s2] sm:$0x1]
  %v24 = vlaneseq
  %v25 = vshrl.u32 %v24, 7
  %v26 = vsub.s32 0, %v25
  %v27 = vrot.slane %v22, %v26
  %v33 = vunpack.c.l.b16 %v18
  %v34 = vunpack.c.l.b16 %v19
  %v35 = vunpack.c.l.b16 %v20
  %v36 = vunpack.c.l.b16 %v21
  %v37 = vpack.c.b16 %v34, %v33
  %v38 = vpack.c.b16 %v36, %v35
  %vm41 = vcmask 261120
  %v43 = vsel %vm41, %v17, 0
  %45 = vmatprep.subr.bf16.mxu0 0
  %46 = vmatpush1.bf16.msra.mxu0 %v37
  %47 = vmatprep.subr.bf16.mxu0 0
  %48 = vmatpush1.bf16.msra.mxu0 %v38
  %49 = vmatprep.subr.bf16.mxu0 0
  %50 = vmatpush1.bf16.msra.mxu0 0
  %51 = vmatprep.subr.bf16.mxu0 0
  %52 = vmatpush1.bf16.msra.mxu0 0
  %53 = vmatprep.subr.bf16.mxu0 0
  %54 = vmatpush1.bf16.msra.mxu0 0
  %55 = vmatprep.subr.bf16.mxu0 0
  %56 = vmatpush1.bf16.msra.mxu0 0
  %57 = vmatprep.subr.bf16.mxu0 0
  %58 = vmatpush1.bf16.msra.mxu0 0
  %59 = vmatprep.subr.bf16.mxu0 0
  %60 = vmatpush1.bf16.msra.mxu0 0
  %61 = vmatprep.subr.bf16.mxu0 0
  %62 = vmatpush1.bf16.msra.mxu0 0
  %63 = vmatprep.subr.bf16.mxu0 0
  %64 = vmatpush1.bf16.msra.mxu0 0
  %65 = vmatprep.subr.bf16.mxu0 0
  %66 = vmatpush1.bf16.msra.mxu0 0
  %67 = vmatprep.subr.bf16.mxu0 0
  %68 = vmatpush1.bf16.msra.mxu0 0
  %69 = vmatprep.subr.bf16.mxu0 0
  %70 = vmatpush1.bf16.msra.mxu0 0
  %71 = vmatprep.subr.bf16.mxu0 0
  %72 = vmatpush1.bf16.msra.mxu0 0
  %73 = vmatprep.subr.bf16.mxu0 0
  %74 = vmatpush1.bf16.msra.mxu0 0
  %75 = vmatprep.subr.bf16.mxu0 0
  %76 = vmatpush1.bf16.msra.mxu0 0
  %77 = vmatprep.mubr.bf16.mxu0 0
  %78 = vmatmul.mubr.bf16.gmra.mrb[0].mxu0 %v43
  %v79 = vpop.f32.mrb[0].mxu0
  %v80 = vadd.f32 %v27, %v79
  %v81 = vpop.f32.mrb[0].mxu0
  %v82 = vpop.f32.mrb[0].mxu0
  %v83 = vadd.f32 %v27, %v82
  %v84 = vpop.f32.mrb[0].mxu0
  %85 = vdwg.mxu0
  %86 = vst [vmem:[%s3] sm:$0xff] %v80
  %87 = vst [vmem:[%s3 + $0x8] sm:$0xff] %v83
  // Predicated region
  $region14: #{_lambda_.53} parent=0 // pred_check
    _
  $region15: #{_lambda_.53} parent=0 // pred_check_branch
    %89 = sbr.rel (0) target = $region17
  $region16: #{_lambda_.53} parent=0 // pred_region
    _
  $region17: #{_lambda_.53} parent=0 // pred_fallthru
    _
  // Predicated region
  $region18: #{_lambda_.53} parent=0 // pred_check
    _
  $region19: #{_lambda_.53} parent=0 // pred_check_branch
    %91 = sbr.rel (0) target = $region21
  $region20: #{_lambda_.53} parent=0 // pred_region
    _
  $region21: #{_lambda_.53} parent=0 // pred_fallthru
    _

// kernel: _lambda_.35
$region0: #{_lambda_.35}
  #allocation0 [shape = 'u32[]', space=smem, size = 0x4, offset = 0x4, fixed_abs, tag = 'smem constant byte address 0x4 - core index']
  #allocation1 [shape = 'u32[144,128]{1,0:T(1,128)}', space=vmem, size = 0x12000, scoped, tag = 'internal scratch']
  %s0 = inlined_call_operand.vmem [shape: f32[16,32], index: 0, kind: input, shape index: {}]
  %s1 = inlined_call_operand.vmem [shape: f32[1,32], index: 1, kind: input, shape index: {}]
  %s2 = inlined_call_operand.vmem [shape: f32[1,32], index: 2, kind: input, shape index: {}]
  %s3 = inlined_call_operand.vmem [shape: f32[16,32], index: 3, kind: output, shape index: {}]
  %s4 = sld [smem:[#allocation0]]
  $region22: #{_lambda_.35} parent=0
    _
  %s6 = ssub.s32 1, %s4
  %s7 = scalar_select 0, %s6, %s4
  // Predicated region
  $region2: #{_lambda_.35} parent=0 // pred_check
    _
  $region3: #{_lambda_.35} parent=0 // pred_check_branch
    %9 = sbr.rel (0) target = $region5
  $region4: #{_lambda_.35} parent=0 // pred_region
    _
  $region5: #{_lambda_.35} parent=0 // pred_fallthru
    _
  // Predicated region
  $region6: #{_lambda_.35} parent=0 // pred_check
    _
  $region7: #{_lambda_.35} parent=0 // pred_check_branch
    %11 = sbr.rel (0) target = $region9
  $region8: #{_lambda_.35} parent=0 // pred_region
    _
  $region9: #{_lambda_.35} parent=0 // pred_fallthru
    _
  // Predicated region
  $region10: #{_lambda_.35} parent=0 // pred_check
    _
  $region11: #{_lambda_.35} parent=0 // pred_check_branch
    %13 = sbr.rel (0) target = $region13
  $region12: #{_lambda_.35} parent=0 // pred_region
    _
  $region13: #{_lambda_.35} parent=0 // pred_fallthru
    _
  %v14 = vld [vmem:[%s0] sm:$0xff]
  %v15 = vld [vmem:[%s0 + $0x8] sm:$0xff]
  %v16 = vld [vmem:[%s1] sm:$0x1]
  %v17 = vld [vmem:[%s2] sm:$0x1]
  %vm18 = vcmask 261120
  %v19 = vsel %vm18, %v14, 0.0
  %20 = vadd.xlane.f32.xlu0 %v19
  %v21 = vpop.xlane.xlu0 %20
  %v22 = vsel %vm18, %v15, 0.0
  %23 = vadd.xlane.f32.xlu0 %v22
  %v24 = vpop.xlane.xlu0 %23
  %v25 = vrcp.pop 32.0
  %v26 = vmul.f32 %v21, %v25
  %v27 = vmul.f32 %v24, %v25
  %v28 = vsub.f32 %v14, %v26
  %v29 = vsub.f32 %v15, %v27
  %v30 = vmul.f32 %v28, %v28
  %v31 = vmul.f32 %v29, %v29
  %v32 = vsel %vm18, %v30, 0.0
  %33 = vadd.xlane.f32.xlu0 %v32
  %v34 = vpop.xlane.xlu0 %33
  %v35 = vsel %vm18, %v31, 0.0
  %36 = vadd.xlane.f32.xlu0 %v35
  %v37 = vpop.xlane.xlu0 %36
  %v38 = vmul.f32 %v34, %v25
  %v39 = vmul.f32 %v37, %v25
  %v40 = vadd.f32 %v38, 1e-05
  %v41 = vadd.f32 %v39, 1e-05
  %v42 = vrsqrt.pop %v40
  %v43 = vrsqrt.pop %v41
  %v44 = vmul.f32 %v28, %v42
  %v45 = vmul.f32 %v29, %v43
  %v47 = vlaneseq
  %v48 = vshrl.u32 %v47, 7
  %v49 = vsub.s32 0, %v48
  %v50 = vrot.slane %v16, %v49
  %v52 = vmul.f32 %v44, %v50
  %v53 = vmul.f32 %v45, %v50
  %v55 = vlaneseq
  %v56 = vshrl.u32 %v55, 7
  %v57 = vsub.s32 0, %v56
  %v58 = vrot.slane %v17, %v57
  %v60 = vadd.f32 %v52, %v58
  %v61 = vadd.f32 %v53, %v58
  %62 = vst.msk [vmem:[%s3] sm:$0xff] %vm18, %v60
  %63 = vst.msk [vmem:[%s3 + $0x8] sm:$0xff] %vm18, %v61
  // Predicated region
  $region14: #{_lambda_.35} parent=0 // pred_check
    _
  $region15: #{_lambda_.35} parent=0 // pred_check_branch
    %65 = sbr.rel (0) target = $region17
  $region16: #{_lambda_.35} parent=0 // pred_region
    _
  $region17: #{_lambda_.35} parent=0 // pred_fallthru
    _
  // Predicated region
  $region18: #{_lambda_.35} parent=0 // pred_check
    _
  $region19: #{_lambda_.35} parent=0 // pred_check_branch
    %67 = sbr.rel (0) target = $region21
  $region20: #{_lambda_.35} parent=0 // pred_region
    _
  $region21: #{_lambda_.35} parent=0 // pred_fallthru
    _

</llo_original>
